<compile_context>
chip_gen: v5e
topology: v5e:2x2
jax: 0.10.0
libtpu: 0.0.40
codegen_flags: <defaults>
</compile_context>

<pallas_src>
import functools

import jax
import jax.numpy as jnp
from jax.experimental import pallas as pl
from jax.experimental.pallas import tpu as pltpu


LN_EPS = 1e-5        # torch.nn.LayerNorm default
NORM_EPS = 1e-12     # torch.nn.functional.normalize default


def _round_up(n: int, m: int) -> int:
    return ((n + m - 1) // m) * m


def triple_kernel(x_ref, wb_ref, gamma_ref, beta_ref, wd_ref, o_ref, acc_ref,
                  *, num_channels: int, inv_hw: float, inv_f: float, f_pad: int):
    """Streaming GAP accumulation + fused head.

    x_ref     : (C, TB, TS) bf16  spatial chunk of the image stream (zero padded)
    wb_ref    : (C, Fp)     f32   backbone stand-in projection (zero padded)
    gamma_ref : (1, Fp)     f32   LayerNorm weight (zero padded)
    beta_ref  : (1, Fp)     f32   LayerNorm bias   (zero padded)
    wd_ref    : (Fp, Vp)    bf16  dense weight, in_feat x out_feat (zero padded)
    o_ref     : (TB, Vp)    f32   L2-normalized embedding (lane-dense slab)
    acc_ref   : (C, TB, 1)  f32   VMEM scratch: running per-(channel,batch) sum
    """
    si = pl.program_id(1)

    # ---- streaming phase ---------------------------------------------------
    # Lane-reduce the chunk once (XLU work, hidden under the HBM DMA) and fold
    # it into the tiny accumulator; no (.., TS)-sized f32 store traffic.
    chunk_sum = jnp.sum(x_ref[...].astype(jnp.float32), axis=-1, keepdims=True)

    @pl.when(si == 0)
    def _():
        acc_ref[...] = chunk_sum            # init from first chunk (no zero pass)

    @pl.when(si > 0)
    def _():
        acc_ref[...] += chunk_sum

    # ---- finalize: run the head once per batch tile -------------------------
    @pl.when(si == pl.num_programs(1) - 1)
    def _():
        tb = acc_ref.shape[1]
        fp = wb_ref.shape[1]

        # GAP -> projection.  The image channel count is tiny and static, so the
        # projection is an unrolled sum of rank-1 outer products on the VPU;
        # this keeps the pooled data in its native (C, TB) orientation and needs
        # no cross-layout reshape/transpose.  Runs once per batch tile (noise
        # relative to the streaming loop).
        feats = jnp.zeros((tb, fp), jnp.float32)
        for c in range(num_channels):                      # static, small (3-4)
            pooled_c = acc_ref[c] * inv_hw                 # (TB, 1) f32
            wb_row = wb_ref[pl.ds(c, 1), :]                # (1, Fp) f32
            feats = feats + pooled_c * wb_row
        feats = jnp.maximum(feats, 0.0)                    # ReLU

        # LayerNorm over the TRUE feature count F.  Padded feature columns are
        # exactly zero; use the centered two-pass variance with an exact
        # correction for the (Fp - F) padded columns (each contributes mu^2).
        mu = jnp.sum(feats, axis=-1, keepdims=True) * inv_f
        d = feats - mu
        var = (jnp.sum(d * d, axis=-1, keepdims=True) - f_pad * (mu * mu)) * inv_f
        var = jnp.maximum(var, 0.0)
        h = d * jax.lax.rsqrt(var + LN_EPS)
        h = h * gamma_ref[...] + beta_ref[...]             # padded cols -> 0

        # Dense (Linear, bias=False): bf16 MXU, f32 accumulate.
        y = jnp.dot(h.astype(jnp.bfloat16), wd_ref[...],
                    preferred_element_type=jnp.float32)    # (TB, Vp)

        # F.normalize(dim=-1): y / max(||y||, eps) == y * rsqrt(max(ss, eps^2)).
        # NOTE: padded batch rows produce finite garbage here and are sliced off
        # in the wrapper; do not reuse the padded slab.
        sumsq = jnp.sum(y * y, axis=-1, keepdims=True)
        o_ref[...] = y * jax.lax.rsqrt(jnp.maximum(sumsq, NORM_EPS * NORM_EPS))


def triple_forward(x, w_backbone, ln_gamma, ln_beta, w_dense,
                   *, batch_tile=64, spatial_tile=None):
    """x: (B, C, H, W) NCHW.  Returns (B, vecdim) L2-normalized embeddings."""
    B, C, H, W = x.shape
    F = w_backbone.shape[1]
    V = w_dense.shape[1]
    HW = H * W

    # Lane-dense padded feature / output dims.
    Fp = _round_up(F, 128)
    Vp = _round_up(V, 128)

    # Batch tile: it is the (bf16) sublane dim of the streamed block, so keep it
    # a multiple of 16.  Cap at half the padded batch when possible so the two
    # v7x TensorCores each get >=1 tile (no-op on single-TC v5e/v6e).
    bp16 = _round_up(B, 16)
    TB = min(_round_up(batch_tile, 16), bp16)
    if bp16 >= 32:
        TB = min(TB, max(16, (bp16 // 2) // 16 * 16))
    Bp = _round_up(B, TB)

    # ---- VMEM budget: count the TOTAL per-step residency --------------------
    try:
        vmem_cap = int(pltpu.get_tpu_info().vmem_capacity_bytes)
    except Exception:
        vmem_cap = 64 << 20            # v7x per-TensorCore physical (most restrictive)
    usable = (vmem_cap * 3) // 4       # leave ~25% headroom for compiler scratch

    # Resident weights (counted at 2x as a conservative bound in case the
    # single-buffer request below is not honored).
    resident_w = 2 * (C * Fp * 4 + Fp * Vp * 2 + 2 * Fp * 4)
    acc_bytes = C * TB * 128 * 4       # (C, TB, 1) f32, lane padded
    out_bytes = 2 * TB * Vp * 4        # double-buffered output block
    head_tmp = 8 * TB * Fp * 4         # feats/h intermediates + regalloc slack
    fixed = resident_w + acc_bytes + out_bytes + head_tmp

    per_lane = 2 * (C * TB * 2)        # double-buffered bf16 stream block, per lane
    if spatial_tile is None:
        stream_budget = max(4 << 20, usable - fixed)
        ts_cap = max(512, (stream_budget // per_lane) // 128 * 128)
    else:
        ts_cap = max(128, _round_up(spatial_tile, 128))
    TS = min(ts_cap, _round_up(HW, 128))
    HWp = _round_up(HW, TS)

    vmem_limit = int(min(usable, max(32 << 20, fixed + per_lane * TS + (4 << 20))))

    # ---- host-side packing ---------------------------------------------------
    # Channels outermost so the batch tile (multiple of 16) is the sublane dim
    # of the streamed block: no sublane padding for small C.  The transpose /
    # cast / pad fuse into the single prep pass XLA already needs for bf16.
    xcb = jnp.transpose(x.reshape(B, C, HW), (1, 0, 2)).astype(jnp.bfloat16)
    xcb = jnp.pad(xcb, ((0, 0), (0, Bp - B), (0, HWp - HW)))

    wb = jnp.pad(w_backbone.astype(jnp.float32), ((0, 0), (0, Fp - F)))
    wd = jnp.pad(w_dense.astype(jnp.bfloat16), ((0, Fp - F), (0, Vp - V)))
    gamma = jnp.pad(ln_gamma.astype(jnp.float32), (0, Fp - F)).reshape(1, Fp)
    beta = jnp.pad(ln_beta.astype(jnp.float32), (0, Fp - F)).reshape(1, Fp)

    kernel = functools.partial(triple_kernel, num_channels=C,
                               inv_hw=1.0 / HW, inv_f=1.0 / F, f_pad=Fp - F)
    num_b, num_s = Bp // TB, HWp // TS

    # Free scheduling hint: this call is HBM-streaming bound.
    cost = pl.CostEstimate(
        flops=int(B * C * HW + 2 * B * C * F + 2 * B * F * V + 10 * B * F),
        transcendentals=int(2 * B),
        bytes_accessed=int(xcb.size * 2 + wb.size * 4 + wd.size * 2
                           + (gamma.size + beta.size) * 4 + Bp * Vp * 4))

    stream_spec = pl.BlockSpec((C, TB, TS), lambda bi, si: (0, bi, si))
    out_spec = pl.BlockSpec((TB, Vp), lambda bi, si: (bi, 0))

    def _resident(shape, single_buffer):
        idx = lambda bi, si, _n=len(shape): (0,) * _n
        if single_buffer:
            # Constant index map -> VMEM resident; single buffer halves footprint.
            return pl.BlockSpec(shape, idx, pipeline_mode=pl.Buffered(1))
        return pl.BlockSpec(shape, idx)

    def _run(single_buffer_residents):
        grid_spec = pltpu.PrefetchScalarGridSpec(
            num_scalar_prefetch=0,
            grid=(num_b, num_s),                         # reduction axis last
            in_specs=[stream_spec,
                      _resident((C, Fp), single_buffer_residents),
                      _resident((1, Fp), single_buffer_residents),
                      _resident((1, Fp), single_buffer_residents),
                      _resident((Fp, Vp), single_buffer_residents)],
            out_specs=out_spec,
            scratch_shapes=[pltpu.VMEM((C, TB, 1), jnp.float32)])
        return pl.pallas_call(
            kernel,
            out_shape=jax.ShapeDtypeStruct((Bp, Vp), jnp.float32),
            grid_spec=grid_spec,
            compiler_params=pltpu.CompilerParams(
                dimension_semantics=("parallel", "arbitrary"),
                vmem_limit_bytes=vmem_limit),
            cost_estimate=cost,
        )(xcb, wb, gamma, beta, wd)

    try:
        out = _run(True)
    except Exception:
        # Fallback for jax versions where pl.Buffered(1) / pipeline_mode is not
        # accepted; the VMEM budget above already assumed double buffering.
        out = _run(False)

    return out[:B, :V]


if __name__ == "__main__":
    # Small, deterministic shapes consistent with the module's forward.
    B, C, H, W = 2, 4, 16, 16      # input images (NCHW)
    NUM_FEATURES = 32              # stand-in for ResNet-101's 2048
    VECDIM = 16                    # stand-in for vecdim=256

    key = jax.random.PRNGKey(0)
    kx, kb, kg, kbt, kd = jax.random.split(key, 5)

    x = jax.random.normal(kx, (B, C, H, W), dtype=jnp.float32)

    # Backbone stand-in projection (C -> NUM_FEATURES).
    w_backbone = jax.random.normal(kb, (C, NUM_FEATURES), dtype=jnp.float32) * 0.1

    # LayerNorm params (gamma ~ 1, beta ~ 0, perturbed so the affine path runs).
    ln_gamma = jnp.ones((NUM_FEATURES,), jnp.float32) \
        + 0.01 * jax.random.normal(kg, (NUM_FEATURES,), dtype=jnp.float32)
    ln_beta = 0.01 * jax.random.normal(kbt, (NUM_FEATURES,), dtype=jnp.float32)

    # Dense weight, stored as (in_features, out_features) = W^T of torch Linear.
    w_dense = jax.random.normal(kd, (NUM_FEATURES, VECDIM), dtype=jnp.float32) \
        * (1.0 / jnp.sqrt(NUM_FEATURES))

    # spatial_tile=128 -> 2 spatial grid steps, exercising the accumulator path.
    out = triple_forward(x, w_backbone, ln_gamma, ln_beta, w_dense,
                         spatial_tile=128)
    out = jax.block_until_ready(out)

    # Reference in plain JAX mirroring the kernel's numerics
    # (bf16 image stream, f32 pooling/projection/LN, bf16 MXU dense).
    HW = H * W
    xb = x.reshape(B, C, HW).astype(jnp.bfloat16).astype(jnp.float32)
    pooled = jnp.mean(xb, axis=-1)
    feats = jnp.maximum(
        jnp.dot(pooled, w_backbone, precision=jax.lax.Precision.HIGHEST), 0.0)
    mu = feats.mean(-1, keepdims=True)
    var = ((feats - mu) ** 2).mean(-1, keepdims=True)
    h = (feats - mu) * jax.lax.rsqrt(var + LN_EPS) * ln_gamma + ln_beta
    y = jnp.dot(h.astype(jnp.bfloat16), w_dense.astype(jnp.bfloat16),
                preferred_element_type=jnp.float32)
    sumsq = jnp.sum(y * y, axis=-1, keepdims=True)
    ref = y * jax.lax.rsqrt(jnp.maximum(sumsq, NORM_EPS * NORM_EPS))

    assert out.shape == (B, VECDIM)
    err = float(jnp.max(jnp.abs(out - ref)))
    assert jnp.allclose(out, ref, atol=1e-2, rtol=1e-2), f"max abs err = {err}"
    print("KERNEL_OK")
</pallas_src>

<mosaic_0001>
module attributes {stable_mosaic.version = 11 : i64} {
  func.func @triple_kernel(%arg0: i32, %arg1: i32, %arg2: memref<4x16x128xbf16, #tpu.memory_space<vmem>>, %arg3: memref<4x128xf32, #tpu.memory_space<vmem>>, %arg4: memref<1x128xf32, #tpu.memory_space<vmem>>, %arg5: memref<1x128xf32, #tpu.memory_space<vmem>>, %arg6: memref<128x128xbf16, #tpu.memory_space<vmem>>, %arg7: memref<16x128xf32, #tpu.memory_space<vmem>>, %arg8: memref<4x16x1xf32, #tpu.memory_space<vmem>>) attributes {dimension_semantics = [#tpu.dimension_semantics<parallel>, #tpu.dimension_semantics<arbitrary>], iteration_bounds = array<i64: 1, 2>, scalar_prefetch = 0 : i64, scratch_operands = 1 : i64, tpu.core_type = #tpu.core_type<tc>, window_params = [{transform_indices = @transform_0, window_bounds = array<i64: 4, 16, 128>}, {pipeline_mode = #tpu.pipeline_mode<synchronous>, transform_indices = @transform_1, window_bounds = array<i64: 4, 128>}, {pipeline_mode = #tpu.pipeline_mode<synchronous>, transform_indices = @transform_2, window_bounds = array<i64: 1, 128>}, {pipeline_mode = #tpu.pipeline_mode<synchronous>, transform_indices = @transform_3, window_bounds = array<i64: 1, 128>}, {pipeline_mode = #tpu.pipeline_mode<synchronous>, transform_indices = @transform_4, window_bounds = array<i64: 128, 128>}, {transform_indices = @transform_5, window_bounds = array<i64: 16, 128>}]} {
    %c0 = arith.constant 0 : index
    %c0_0 = arith.constant 0 : index
    %c0_1 = arith.constant 0 : index
    %0 = vector.load %arg2[%c0, %c0_0, %c0_1] : memref<4x16x128xbf16, #tpu.memory_space<vmem>>, vector<4x16x128xbf16>
    %1 = arith.extf %0 : vector<4x16x128xbf16> to vector<4x16x128xf32>
    %cst = arith.constant dense<0.000000e+00> : vector<4x16xf32>
    %2 = vector.multi_reduction <add>, %1, %cst [2] : vector<4x16x128xf32> to vector<4x16xf32>
    %3 = vector.shape_cast %2 : vector<4x16xf32> to vector<4x16x1xf32>
    %c0_i32 = arith.constant 0 : i32
    %4 = arith.cmpi eq, %arg1, %c0_i32 : i32
    %5 = arith.extui %4 : i1 to i32
    %c0_i32_2 = arith.constant 0 : i32
    %6 = arith.cmpi ne, %5, %c0_i32_2 : i32
    scf.if %6 {
      %c0_6 = arith.constant 0 : index
      %c0_7 = arith.constant 0 : index
      %c0_8 = arith.constant 0 : index
      %13 = vector.load %arg8[%c0_6, %c0_7, %c0_8] : memref<4x16x1xf32, #tpu.memory_space<vmem>>, vector<4x16x1xf32>
      tpu.vector_store %arg8[%c0_6, %c0_7, %c0_8], %3 {strides = array<i32>} : memref<4x16x1xf32, #tpu.memory_space<vmem>>, vector<4x16x1xf32>,
    } else {
    }
    %c0_i32_3 = arith.constant 0 : i32
    %7 = arith.cmpi sgt, %arg1, %c0_i32_3 : i32
    %8 = arith.extui %7 : i1 to i32
    %c0_i32_4 = arith.constant 0 : i32
    %9 = arith.cmpi ne, %8, %c0_i32_4 : i32
    scf.if %9 {
      %c0_6 = arith.constant 0 : index
      %c0_7 = arith.constant 0 : index
      %c0_8 = arith.constant 0 : index
      %13 = vector.load %arg8[%c0_6, %c0_7, %c0_8] : memref<4x16x1xf32, #tpu.memory_space<vmem>>, vector<4x16x1xf32>
      %14 = arith.addf %13, %3 : vector<4x16x1xf32>
      %c0_9 = arith.constant 0 : index
      %c0_10 = arith.constant 0 : index
      %c0_11 = arith.constant 0 : index
      %15 = vector.load %arg8[%c0_9, %c0_10, %c0_11] : memref<4x16x1xf32, #tpu.memory_space<vmem>>, vector<4x16x1xf32>
      tpu.vector_store %arg8[%c0_9, %c0_10, %c0_11], %14 {strides = array<i32>} : memref<4x16x1xf32, #tpu.memory_space<vmem>>, vector<4x16x1xf32>,
    } else {
    }
    %c1_i32 = arith.constant 1 : i32
    %10 = arith.cmpi eq, %arg1, %c1_i32 : i32
    %11 = arith.extui %10 : i1 to i32
    %c0_i32_5 = arith.constant 0 : i32
    %12 = arith.cmpi ne, %11, %c0_i32_5 : i32
    scf.if %12 {
      %cst_6 = arith.constant 0.000000e+00 : f32
      %13 = vector.broadcast %cst_6 : f32 to vector<16x128xf32>
      %c0_7 = arith.constant 0 : index
      %c0_8 = arith.constant 0 : index
      %c0_9 = arith.constant 0 : index
      %14 = vector.load %arg8[%c0_7, %c0_8, %c0_9] : memref<4x16x1xf32, #tpu.memory_space<vmem>>, vector<1x16x1xf32>
      %15 = vector.shape_cast %14 : vector<1x16x1xf32> to vector<16x1xf32>
      %cst_10 = arith.constant 3.906250e-03 : f32
      %16 = vector.broadcast %cst_10 : f32 to vector<16x1xf32>
      %17 = arith.mulf %15, %16 : vector<16x1xf32>
      %c0_11 = arith.constant 0 : index
      %c0_12 = arith.constant 0 : index
      %18 = vector.load %arg3[%c0_11, %c0_12] : memref<4x128xf32, #tpu.memory_space<vmem>>, vector<1x128xf32>
      %19 = vector.broadcast %17 : vector<16x1xf32> to vector<16x128xf32>
      %20 = vector.broadcast %18 : vector<1x128xf32> to vector<16x128xf32>
      %21 = arith.mulf %19, %20 : vector<16x128xf32>
      %22 = arith.addf %13, %21 : vector<16x128xf32>
      %c1 = arith.constant 1 : index
      %c0_13 = arith.constant 0 : index
      %c0_14 = arith.constant 0 : index
      %23 = vector.load %arg8[%c1, %c0_13, %c0_14] : memref<4x16x1xf32, #tpu.memory_space<vmem>>, vector<1x16x1xf32>
      %24 = vector.shape_cast %23 : vector<1x16x1xf32> to vector<16x1xf32>
      %cst_15 = arith.constant 3.906250e-03 : f32
      %25 = vector.broadcast %cst_15 : f32 to vector<16x1xf32>
      %26 = arith.mulf %24, %25 : vector<16x1xf32>
      %c1_16 = arith.constant 1 : index
      %c0_17 = arith.constant 0 : index
      %27 = vector.load %arg3[%c1_16, %c0_17] : memref<4x128xf32, #tpu.memory_space<vmem>>, vector<1x128xf32>
      %28 = vector.broadcast %26 : vector<16x1xf32> to vector<16x128xf32>
      %29 = vector.broadcast %27 : vector<1x128xf32> to vector<16x128xf32>
      %30 = arith.mulf %28, %29 : vector<16x128xf32>
      %31 = arith.addf %22, %30 : vector<16x128xf32>
      %c2 = arith.constant 2 : index
      %c0_18 = arith.constant 0 : index
      %c0_19 = arith.constant 0 : index
      %32 = vector.load %arg8[%c2, %c0_18, %c0_19] : memref<4x16x1xf32, #tpu.memory_space<vmem>>, vector<1x16x1xf32>
      %33 = vector.shape_cast %32 : vector<1x16x1xf32> to vector<16x1xf32>
      %cst_20 = arith.constant 3.906250e-03 : f32
      %34 = vector.broadcast %cst_20 : f32 to vector<16x1xf32>
      %35 = arith.mulf %33, %34 : vector<16x1xf32>
      %c2_21 = arith.constant 2 : index
      %c0_22 = arith.constant 0 : index
      %36 = vector.load %arg3[%c2_21, %c0_22] : memref<4x128xf32, #tpu.memory_space<vmem>>, vector<1x128xf32>
      %37 = vector.broadcast %35 : vector<16x1xf32> to vector<16x128xf32>
      %38 = vector.broadcast %36 : vector<1x128xf32> to vector<16x128xf32>
      %39 = arith.mulf %37, %38 : vector<16x128xf32>
      %40 = arith.addf %31, %39 : vector<16x128xf32>
      %c3 = arith.constant 3 : index
      %c0_23 = arith.constant 0 : index
      %c0_24 = arith.constant 0 : index
      %41 = vector.load %arg8[%c3, %c0_23, %c0_24] : memref<4x16x1xf32, #tpu.memory_space<vmem>>, vector<1x16x1xf32>
      %42 = vector.shape_cast %41 : vector<1x16x1xf32> to vector<16x1xf32>
      %cst_25 = arith.constant 3.906250e-03 : f32
      %43 = vector.broadcast %cst_25 : f32 to vector<16x1xf32>
      %44 = arith.mulf %42, %43 : vector<16x1xf32>
      %c3_26 = arith.constant 3 : index
      %c0_27 = arith.constant 0 : index
      %45 = vector.load %arg3[%c3_26, %c0_27] : memref<4x128xf32, #tpu.memory_space<vmem>>, vector<1x128xf32>
      %46 = vector.broadcast %44 : vector<16x1xf32> to vector<16x128xf32>
      %47 = vector.broadcast %45 : vector<1x128xf32> to vector<16x128xf32>
      %48 = arith.mulf %46, %47 : vector<16x128xf32>
      %49 = arith.addf %40, %48 : vector<16x128xf32>
      %cst_28 = arith.constant 0.000000e+00 : f32
      %50 = vector.broadcast %cst_28 : f32 to vector<16x128xf32>
      %51 = arith.maximumf %49, %50 : vector<16x128xf32>
      %cst_29 = arith.constant dense<0.000000e+00> : vector<16xf32>
      %52 = vector.multi_reduction <add>, %51, %cst_29 [1] : vector<16x128xf32> to vector<16xf32>
      %53 = vector.shape_cast %52 : vector<16xf32> to vector<16x1xf32>
      %cst_30 = arith.constant 3.125000e-02 : f32
      %54 = vector.broadcast %cst_30 : f32 to vector<16x1xf32>
      %55 = arith.mulf %53, %54 : vector<16x1xf32>
      %56 = vector.broadcast %55 : vector<16x1xf32> to vector<16x128xf32>
      %57 = arith.subf %51, %56 : vector<16x128xf32>
      %58 = arith.mulf %57, %57 : vector<16x128xf32>
      %cst_31 = arith.constant dense<0.000000e+00> : vector<16xf32>
      %59 = vector.multi_reduction <add>, %58, %cst_31 [1] : vector<16x128xf32> to vector<16xf32>
      %60 = vector.shape_cast %59 : vector<16xf32> to vector<16x1xf32>
      %61 = arith.mulf %55, %55 : vector<16x1xf32>
      %cst_32 = arith.constant 9.600000e+01 : f32
      %62 = vector.broadcast %cst_32 : f32 to vector<16x1xf32>
      %63 = arith.mulf %62, %61 : vector<16x1xf32>
      %64 = arith.subf %60, %63 : vector<16x1xf32>
      %cst_33 = arith.constant 3.125000e-02 : f32
      %65 = vector.broadcast %cst_33 : f32 to vector<16x1xf32>
      %66 = arith.mulf %64, %65 : vector<16x1xf32>
      %cst_34 = arith.constant 0.000000e+00 : f32
      %67 = vector.broadcast %cst_34 : f32 to vector<16x1xf32>
      %68 = arith.maximumf %66, %67 : vector<16x1xf32>
      %cst_35 = arith.constant 9.99999974E-6 : f32
      %69 = vector.broadcast %cst_35 : f32 to vector<16x1xf32>
      %70 = arith.addf %68, %69 : vector<16x1xf32>
      %71 = math.rsqrt %70 : vector<16x1xf32>
      %72 = vector.broadcast %71 : vector<16x1xf32> to vector<16x128xf32>
      %73 = arith.mulf %57, %72 : vector<16x128xf32>
      %c0_36 = arith.constant 0 : index
      %c0_37 = arith.constant 0 : index
      %74 = vector.load %arg4[%c0_36, %c0_37] : memref<1x128xf32, #tpu.memory_space<vmem>>, vector<1x128xf32>
      %75 = vector.broadcast %74 : vector<1x128xf32> to vector<16x128xf32>
      %76 = arith.mulf %73, %75 : vector<16x128xf32>
      %c0_38 = arith.constant 0 : index
      %c0_39 = arith.constant 0 : index
      %77 = vector.load %arg5[%c0_38, %c0_39] : memref<1x128xf32, #tpu.memory_space<vmem>>, vector<1x128xf32>
      %78 = vector.broadcast %77 : vector<1x128xf32> to vector<16x128xf32>
      %79 = arith.addf %76, %78 : vector<16x128xf32>
      %80 = arith.truncf %79 : vector<16x128xf32> to vector<16x128xbf16>
      %c0_40 = arith.constant 0 : index
      %c0_41 = arith.constant 0 : index
      %81 = vector.load %arg6[%c0_40, %c0_41] : memref<128x128xbf16, #tpu.memory_space<vmem>>, vector<128x128xbf16>
      %cst_42 = arith.constant dense<0.000000e+00> : vector<16x128xf32>
      %82 = tpu.matmul %80, %81, %cst_42 {dimension_numbers = #tpu.dot_dimension_numbers<[1], [0], [0], [1], [0, 0, 1, 1], [], []>} : vector<16x128xbf16>, vector<128x128xbf16>, vector<16x128xf32> -> vector<16x128xf32>
      %83 = arith.mulf %82, %82 : vector<16x128xf32>
      %cst_43 = arith.constant dense<0.000000e+00> : vector<16xf32>
      %84 = vector.multi_reduction <add>, %83, %cst_43 [1] : vector<16x128xf32> to vector<16xf32>
      %85 = vector.shape_cast %84 : vector<16xf32> to vector<16x1xf32>
      %cst_44 = arith.constant 1.000000e-24 : f32
      %86 = vector.broadcast %cst_44 : f32 to vector<16x1xf32>
      %87 = arith.maximumf %85, %86 : vector<16x1xf32>
      %88 = math.rsqrt %87 : vector<16x1xf32>
      %89 = vector.broadcast %88 : vector<16x1xf32> to vector<16x128xf32>
      %90 = arith.mulf %82, %89 : vector<16x128xf32>
      %c0_45 = arith.constant 0 : index
      %c0_46 = arith.constant 0 : index
      %91 = vector.load %arg7[%c0_45, %c0_46] : memref<16x128xf32, #tpu.memory_space<vmem>>, vector<16x128xf32>
      tpu.vector_store %arg7[%c0_45, %c0_46], %90 {strides = array<i32>} : memref<16x128xf32, #tpu.memory_space<vmem>>, vector<16x128xf32>,
    } else {
    }
    return
  }
  func.func @transform_0(%arg0: i32, %arg1: i32) -> (i32, i32, i32) {
    %c0_i32 = arith.constant 0 : i32
    %c0_i32_0 = arith.constant 0 : i32
    return %c0_i32, %arg0, %arg1 : i32, i32, i32
  }
  func.func @transform_1(%arg0: i32, %arg1: i32) -> (i32, i32) {
    %c0_i32 = arith.constant 0 : i32
    %c0_i32_0 = arith.constant 0 : i32
    %c0_i32_1 = arith.constant 0 : i32
    return %c0_i32, %c0_i32_0 : i32, i32
  }
  func.func @transform_2(%arg0: i32, %arg1: i32) -> (i32, i32) {
    %c0_i32 = arith.constant 0 : i32
    %c0_i32_0 = arith.constant 0 : i32
    %c0_i32_1 = arith.constant 0 : i32
    return %c0_i32, %c0_i32_0 : i32, i32
  }
  func.func @transform_3(%arg0: i32, %arg1: i32) -> (i32, i32) {
    %c0_i32 = arith.constant 0 : i32
    %c0_i32_0 = arith.constant 0 : i32
    %c0_i32_1 = arith.constant 0 : i32
    return %c0_i32, %c0_i32_0 : i32, i32
  }
  func.func @transform_4(%arg0: i32, %arg1: i32) -> (i32, i32) {
    %c0_i32 = arith.constant 0 : i32
    %c0_i32_0 = arith.constant 0 : i32
    %c0_i32_1 = arith.constant 0 : i32
    return %c0_i32, %c0_i32_0 : i32, i32
  }
  func.func @transform_5(%arg0: i32, %arg1: i32) -> (i32, i32) {
    %c0_i32 = arith.constant 0 : i32
    %c0_i32_0 = arith.constant 0 : i32
    return %arg0, %c0_i32 : i32, i32
  }
}

module attributes {stable_mosaic.version = 11 : i64} {
  func.func @triple_kernel(%arg0: i32, %arg1: i32, %arg2: memref<4x16x128xbf16, #tpu.memory_space<vmem>>, %arg3: memref<4x128xf32, #tpu.memory_space<vmem>>, %arg4: memref<1x128xf32, #tpu.memory_space<vmem>>, %arg5: memref<1x128xf32, #tpu.memory_space<vmem>>, %arg6: memref<128x128xbf16, #tpu.memory_space<vmem>>, %arg7: memref<16x128xf32, #tpu.memory_space<vmem>>, %arg8: memref<4x16x1xf32, #tpu.memory_space<vmem>>) attributes {dimension_semantics = [#tpu.dimension_semantics<parallel>, #tpu.dimension_semantics<arbitrary>], iteration_bounds = array<i64: 1, 2>, scalar_prefetch = 0 : i64, scratch_operands = 1 : i64, tpu.core_type = #tpu.core_type<tc>, window_params = [{transform_indices = @transform_0, window_bounds = array<i64: 4, 16, 128>}, {pipeline_mode = #tpu.pipeline_mode<synchronous>, transform_indices = @transform_1, window_bounds = array<i64: 4, 128>}, {pipeline_mode = #tpu.pipeline_mode<synchronous>, transform_indices = @transform_2, window_bounds = array<i64: 1, 128>}, {pipeline_mode = #tpu.pipeline_mode<synchronous>, transform_indices = @transform_3, window_bounds = array<i64: 1, 128>}, {pipeline_mode = #tpu.pipeline_mode<synchronous>, transform_indices = @transform_4, window_bounds = array<i64: 128, 128>}, {transform_indices = @transform_5, window_bounds = array<i64: 16, 128>}]} {
    %c0 = arith.constant 0 : index
    %c0_0 = arith.constant 0 : index
    %c0_1 = arith.constant 0 : index
    %0 = vector.load %arg2[%c0, %c0_0, %c0_1] : memref<4x16x128xbf16, #tpu.memory_space<vmem>>, vector<4x16x128xbf16>
    %1 = arith.extf %0 : vector<4x16x128xbf16> to vector<4x16x128xf32>
    %cst = arith.constant dense<0.000000e+00> : vector<4x16xf32>
    %2 = vector.multi_reduction <add>, %1, %cst [2] : vector<4x16x128xf32> to vector<4x16xf32>
    %3 = vector.shape_cast %2 : vector<4x16xf32> to vector<4x16x1xf32>
    %c0_i32 = arith.constant 0 : i32
    %4 = arith.cmpi eq, %arg1, %c0_i32 : i32
    %5 = arith.extui %4 : i1 to i32
    %c0_i32_2 = arith.constant 0 : i32
    %6 = arith.cmpi ne, %5, %c0_i32_2 : i32
    scf.if %6 {
      %c0_6 = arith.constant 0 : index
      %c0_7 = arith.constant 0 : index
      %c0_8 = arith.constant 0 : index
      %13 = vector.load %arg8[%c0_6, %c0_7, %c0_8] : memref<4x16x1xf32, #tpu.memory_space<vmem>>, vector<4x16x1xf32>
      tpu.vector_store %arg8[%c0_6, %c0_7, %c0_8], %3 {strides = array<i32>} : memref<4x16x1xf32, #tpu.memory_space<vmem>>, vector<4x16x1xf32>,
    } else {
    }
    %c0_i32_3 = arith.constant 0 : i32
    %7 = arith.cmpi sgt, %arg1, %c0_i32_3 : i32
    %8 = arith.extui %7 : i1 to i32
    %c0_i32_4 = arith.constant 0 : i32
    %9 = arith.cmpi ne, %8, %c0_i32_4 : i32
    scf.if %9 {
      %c0_6 = arith.constant 0 : index
      %c0_7 = arith.constant 0 : index
      %c0_8 = arith.constant 0 : index
      %13 = vector.load %arg8[%c0_6, %c0_7, %c0_8] : memref<4x16x1xf32, #tpu.memory_space<vmem>>, vector<4x16x1xf32>
      %14 = arith.addf %13, %3 : vector<4x16x1xf32>
      %c0_9 = arith.constant 0 : index
      %c0_10 = arith.constant 0 : index
      %c0_11 = arith.constant 0 : index
      %15 = vector.load %arg8[%c0_9, %c0_10, %c0_11] : memref<4x16x1xf32, #tpu.memory_space<vmem>>, vector<4x16x1xf32>
      tpu.vector_store %arg8[%c0_9, %c0_10, %c0_11], %14 {strides = array<i32>} : memref<4x16x1xf32, #tpu.memory_space<vmem>>, vector<4x16x1xf32>,
    } else {
    }
    %c1_i32 = arith.constant 1 : i32
    %10 = arith.cmpi eq, %arg1, %c1_i32 : i32
    %11 = arith.extui %10 : i1 to i32
    %c0_i32_5 = arith.constant 0 : i32
    %12 = arith.cmpi ne, %11, %c0_i32_5 : i32
    scf.if %12 {
      %cst_6 = arith.constant 0.000000e+00 : f32
      %13 = vector.broadcast %cst_6 : f32 to vector<16x128xf32>
      %c0_7 = arith.constant 0 : index
      %c0_8 = arith.constant 0 : index
      %c0_9 = arith.constant 0 : index
      %14 = vector.load %arg8[%c0_7, %c0_8, %c0_9] : memref<4x16x1xf32, #tpu.memory_space<vmem>>, vector<1x16x1xf32>
      %15 = vector.shape_cast %14 : vector<1x16x1xf32> to vector<16x1xf32>
      %cst_10 = arith.constant 3.906250e-03 : f32
      %16 = vector.broadcast %cst_10 : f32 to vector<16x1xf32>
      %17 = arith.mulf %15, %16 : vector<16x1xf32>
      %c0_11 = arith.constant 0 : index
      %c0_12 = arith.constant 0 : index
      %18 = vector.load %arg3[%c0_11, %c0_12] : memref<4x128xf32, #tpu.memory_space<vmem>>, vector<1x128xf32>
      %19 = vector.broadcast %17 : vector<16x1xf32> to vector<16x128xf32>
      %20 = vector.broadcast %18 : vector<1x128xf32> to vector<16x128xf32>
      %21 = arith.mulf %19, %20 : vector<16x128xf32>
      %22 = arith.addf %13, %21 : vector<16x128xf32>
      %c1 = arith.constant 1 : index
      %c0_13 = arith.constant 0 : index
      %c0_14 = arith.constant 0 : index
      %23 = vector.load %arg8[%c1, %c0_13, %c0_14] : memref<4x16x1xf32, #tpu.memory_space<vmem>>, vector<1x16x1xf32>
      %24 = vector.shape_cast %23 : vector<1x16x1xf32> to vector<16x1xf32>
      %cst_15 = arith.constant 3.906250e-03 : f32
      %25 = vector.broadcast %cst_15 : f32 to vector<16x1xf32>
      %26 = arith.mulf %24, %25 : vector<16x1xf32>
      %c1_16 = arith.constant 1 : index
      %c0_17 = arith.constant 0 : index
      %27 = vector.load %arg3[%c1_16, %c0_17] : memref<4x128xf32, #tpu.memory_space<vmem>>, vector<1x128xf32>
      %28 = vector.broadcast %26 : vector<16x1xf32> to vector<16x128xf32>
      %29 = vector.broadcast %27 : vector<1x128xf32> to vector<16x128xf32>
      %30 = arith.mulf %28, %29 : vector<16x128xf32>
      %31 = arith.addf %22, %30 : vector<16x128xf32>
      %c2 = arith.constant 2 : index
      %c0_18 = arith.constant 0 : index
      %c0_19 = arith.constant 0 : index
      %32 = vector.load %arg8[%c2, %c0_18, %c0_19] : memref<4x16x1xf32, #tpu.memory_space<vmem>>, vector<1x16x1xf32>
      %33 = vector.shape_cast %32 : vector<1x16x1xf32> to vector<16x1xf32>
      %cst_20 = arith.constant 3.906250e-03 : f32
      %34 = vector.broadcast %cst_20 : f32 to vector<16x1xf32>
      %35 = arith.mulf %33, %34 : vector<16x1xf32>
      %c2_21 = arith.constant 2 : index
      %c0_22 = arith.constant 0 : index
      %36 = vector.load %arg3[%c2_21, %c0_22] : memref<4x128xf32, #tpu.memory_space<vmem>>, vector<1x128xf32>
      %37 = vector.broadcast %35 : vector<16x1xf32> to vector<16x128xf32>
      %38 = vector.broadcast %36 : vector<1x128xf32> to vector<16x128xf32>
      %39 = arith.mulf %37, %38 : vector<16x128xf32>
      %40 = arith.addf %31, %39 : vector<16x128xf32>
      %c3 = arith.constant 3 : index
      %c0_23 = arith.constant 0 : index
      %c0_24 = arith.constant 0 : index
      %41 = vector.load %arg8[%c3, %c0_23, %c0_24] : memref<4x16x1xf32, #tpu.memory_space<vmem>>, vector<1x16x1xf32>
      %42 = vector.shape_cast %41 : vector<1x16x1xf32> to vector<16x1xf32>
      %cst_25 = arith.constant 3.906250e-03 : f32
      %43 = vector.broadcast %cst_25 : f32 to vector<16x1xf32>
      %44 = arith.mulf %42, %43 : vector<16x1xf32>
      %c3_26 = arith.constant 3 : index
      %c0_27 = arith.constant 0 : index
      %45 = vector.load %arg3[%c3_26, %c0_27] : memref<4x128xf32, #tpu.memory_space<vmem>>, vector<1x128xf32>
      %46 = vector.broadcast %44 : vector<16x1xf32> to vector<16x128xf32>
      %47 = vector.broadcast %45 : vector<1x128xf32> to vector<16x128xf32>
      %48 = arith.mulf %46, %47 : vector<16x128xf32>
      %49 = arith.addf %40, %48 : vector<16x128xf32>
      %cst_28 = arith.constant 0.000000e+00 : f32
      %50 = vector.broadcast %cst_28 : f32 to vector<16x128xf32>
      %51 = arith.maximumf %49, %50 : vector<16x128xf32>
      %cst_29 = arith.constant dense<0.000000e+00> : vector<16xf32>
      %52 = vector.multi_reduction <add>, %51, %cst_29 [1] : vector<16x128xf32> to vector<16xf32>
      %53 = vector.shape_cast %52 : vector<16xf32> to vector<16x1xf32>
      %cst_30 = arith.constant 3.125000e-02 : f32
      %54 = vector.broadcast %cst_30 : f32 to vector<16x1xf32>
      %55 = arith.mulf %53, %54 : vector<16x1xf32>
      %56 = vector.broadcast %55 : vector<16x1xf32> to vector<16x128xf32>
      %57 = arith.subf %51, %56 : vector<16x128xf32>
      %58 = arith.mulf %57, %57 : vector<16x128xf32>
      %cst_31 = arith.constant dense<0.000000e+00> : vector<16xf32>
      %59 = vector.multi_reduction <add>, %58, %cst_31 [1] : vector<16x128xf32> to vector<16xf32>
      %60 = vector.shape_cast %59 : vector<16xf32> to vector<16x1xf32>
      %61 = arith.mulf %55, %55 : vector<16x1xf32>
      %cst_32 = arith.constant 9.600000e+01 : f32
      %62 = vector.broadcast %cst_32 : f32 to vector<16x1xf32>
      %63 = arith.mulf %62, %61 : vector<16x1xf32>
      %64 = arith.subf %60, %63 : vector<16x1xf32>
      %cst_33 = arith.constant 3.125000e-02 : f32
      %65 = vector.broadcast %cst_33 : f32 to vector<16x1xf32>
      %66 = arith.mulf %64, %65 : vector<16x1xf32>
      %cst_34 = arith.constant 0.000000e+00 : f32
      %67 = vector.broadcast %cst_34 : f32 to vector<16x1xf32>
      %68 = arith.maximumf %66, %67 : vector<16x1xf32>
      %cst_35 = arith.constant 9.99999974E-6 : f32
      %69 = vector.broadcast %cst_35 : f32 to vector<16x1xf32>
      %70 = arith.addf %68, %69 : vector<16x1xf32>
      %71 = math.rsqrt %70 : vector<16x1xf32>
      %72 = vector.broadcast %71 : vector<16x1xf32> to vector<16x128xf32>
      %73 = arith.mulf %57, %72 : vector<16x128xf32>
      %c0_36 = arith.constant 0 : index
      %c0_37 = arith.constant 0 : index
      %74 = vector.load %arg4[%c0_36, %c0_37] : memref<1x128xf32, #tpu.memory_space<vmem>>, vector<1x128xf32>
      %75 = vector.broadcast %74 : vector<1x128xf32> to vector<16x128xf32>
      %76 = arith.mulf %73, %75 : vector<16x128xf32>
      %c0_38 = arith.constant 0 : index
      %c0_39 = arith.constant 0 : index
      %77 = vector.load %arg5[%c0_38, %c0_39] : memref<1x128xf32, #tpu.memory_space<vmem>>, vector<1x128xf32>
      %78 = vector.broadcast %77 : vector<1x128xf32> to vector<16x128xf32>
      %79 = arith.addf %76, %78 : vector<16x128xf32>
      %80 = arith.truncf %79 : vector<16x128xf32> to vector<16x128xbf16>
      %c0_40 = arith.constant 0 : index
      %c0_41 = arith.constant 0 : index
      %81 = vector.load %arg6[%c0_40, %c0_41] : memref<128x128xbf16, #tpu.memory_space<vmem>>, vector<128x128xbf16>
      %cst_42 = arith.constant dense<0.000000e+00> : vector<16x128xf32>
      %82 = tpu.matmul %80, %81, %cst_42 {dimension_numbers = #tpu.dot_dimension_numbers<[1], [0], [0], [1], [0, 0, 1, 1], [], []>} : vector<16x128xbf16>, vector<128x128xbf16>, vector<16x128xf32> -> vector<16x128xf32>
      %83 = arith.mulf %82, %82 : vector<16x128xf32>
      %cst_43 = arith.constant dense<0.000000e+00> : vector<16xf32>
      %84 = vector.multi_reduction <add>, %83, %cst_43 [1] : vector<16x128xf32> to vector<16xf32>
      %85 = vector.shape_cast %84 : vector<16xf32> to vector<16x1xf32>
      %cst_44 = arith.constant 1.000000e-24 : f32
      %86 = vector.broadcast %cst_44 : f32 to vector<16x1xf32>
      %87 = arith.maximumf %85, %86 : vector<16x1xf32>
      %88 = math.rsqrt %87 : vector<16x1xf32>
      %89 = vector.broadcast %88 : vector<16x1xf32> to vector<16x128xf32>
      %90 = arith.mulf %82, %89 : vector<16x128xf32>
      %c0_45 = arith.constant 0 : index
      %c0_46 = arith.constant 0 : index
      %91 = vector.load %arg7[%c0_45, %c0_46] : memref<16x128xf32, #tpu.memory_space<vmem>>, vector<16x128xf32>
      tpu.vector_store %arg7[%c0_45, %c0_46], %90 {strides = array<i32>} : memref<16x128xf32, #tpu.memory_space<vmem>>, vector<16x128xf32>,
    } else {
    }
    return
  }
  func.func @transform_0(%arg0: i32, %arg1: i32) -> (i32, i32, i32) {
    %c0_i32 = arith.constant 0 : i32
    %c0_i32_0 = arith.constant 0 : i32
    return %c0_i32, %arg0, %arg1 : i32, i32, i32
  }
  func.func @transform_1(%arg0: i32, %arg1: i32) -> (i32, i32) {
    %c0_i32 = arith.constant 0 : i32
    %c0_i32_0 = arith.constant 0 : i32
    %c0_i32_1 = arith.constant 0 : i32
    return %c0_i32, %c0_i32_0 : i32, i32
  }
  func.func @transform_2(%arg0: i32, %arg1: i32) -> (i32, i32) {
    %c0_i32 = arith.constant 0 : i32
    %c0_i32_0 = arith.constant 0 : i32
    %c0_i32_1 = arith.constant 0 : i32
    return %c0_i32, %c0_i32_0 : i32, i32
  }
  func.func @transform_3(%arg0: i32, %arg1: i32) -> (i32, i32) {
    %c0_i32 = arith.constant 0 : i32
    %c0_i32_0 = arith.constant 0 : i32
    %c0_i32_1 = arith.constant 0 : i32
    return %c0_i32, %c0_i32_0 : i32, i32
  }
  func.func @transform_4(%arg0: i32, %arg1: i32) -> (i32, i32) {
    %c0_i32 = arith.constant 0 : i32
    %c0_i32_0 = arith.constant 0 : i32
    %c0_i32_1 = arith.constant 0 : i32
    return %c0_i32, %c0_i32_0 : i32, i32
  }
  func.func @transform_5(%arg0: i32, %arg1: i32) -> (i32, i32) {
    %c0_i32 = arith.constant 0 : i32
    %c0_i32_0 = arith.constant 0 : i32
    return %arg0, %c0_i32 : i32, i32
  }
}

</mosaic_0001>

<llo_original>
// kernel: tpu_custom_call.1
$region0: #{tpu_custom_call.1}
  #allocation0 [shape = 'u32[]', space=smem, size = 0x4, offset = 0x4, fixed_abs, tag = 'smem constant byte address 0x4 - core index']
  #allocation1 [shape = 'u32[72,128]{1,0:T(1,128)}', space=vmem, size = 0x9000, scoped, tag = 'internal scratch']
  #allocation2 [shape = 'f32[4,16,1]{2,1,0:T(8,128)}', space=vmem, size = 0x8000, scoped, tag = 'scratch operand']
  %s0 = inlined_call_operand.hbm [shape: bf16[4,16,256], index: 0, kind: input, shape index: {}]
  %s1 = inlined_call_operand.hbm [shape: f32[4,128], index: 1, kind: input, shape index: {}]
  %s2 = inlined_call_operand.vmem [shape: f32[1,128], index: 2, kind: input, shape index: {}]
  %s3 = inlined_call_operand.vmem [shape: f32[1,128], index: 3, kind: input, shape index: {}]
  %s4 = inlined_call_operand.hbm [shape: bf16[128,128], index: 4, kind: input, shape index: {}]
  %s5 = inlined_call_operand.hbm [shape: f32[16,128], index: 5, kind: output, shape index: {}]
  %s6 = sld [smem:[#allocation0]]
  $region77: #{tpu_custom_call.1} parent=0
    _
  %s8 = ssub.s32 1, %s6
  %s9 = scalar_select 0, %s8, %s6
  $region1: #{tpu_custom_call.1} parent=0
    #allocation3 [shape = 'u8[32768]{0}', space=vmem, size = 0x8000, scoped, tag = 'input window, operand 0']
    #allocation4 [shape = 's32[2]{0}', space=sflag, size = 0x8, scoped, tag = 'scoped memory for tpu_custom_call.1']
    #allocation5 [shape = 's32[2]{0}', space=sflag, size = 0x8, scoped, tag = 'scoped memory for tpu_custom_call.1']
    #allocation6 [shape = 'u8[2048]{0}', space=vmem, size = 0x800, scoped, tag = 'input window, operand 1, single buffered']
    #allocation7 [shape = 's32[1]{0}', space=sflag, size = 0x4, scoped, tag = 'scoped memory for tpu_custom_call.1']
    #allocation8 [shape = 'u8[32768]{0}', space=vmem, size = 0x8000, scoped, tag = 'input window, operand 4, single buffered']
    #allocation9 [shape = 'u8[8192]{0}', space=vmem, size = 0x2000, scoped, tag = 'output window, operand 0, single buffered']
    %10 = vsyncpa [#allocation4], 0
    %s11 = scalar_lea.sflag [#allocation4], 1
    %12 = vsyncpa %s11, 0
    %13 = vsyncpa [#allocation7], 0
    %14 = vsyncpa [#allocation5], 0
    loop: start=0, step=1, limit=4
    $region2: #{tpu_custom_call.1} parent=1 // loop_pre_header
      _
    $region3: #{tpu_custom_call.1} parent=1 // loop_header
      %s16 = sphi 0, %s20
      %p17 = scmp.ge.s32.totalorder %s16, 4
      %s23 = sphi 0, %s35
      %s24 = sphi 0, %s31
      %s25 = sphi 0, %s23
      %s26 = sphi 0, %s24
      %s27 = sphi 0, %s25
      %s28 = sphi 0, %s26
      %s40 = sphi 0, %s42
      %s43 = sphi 0, %s40
      %s44 = sphi 0, %s43
      %s60 = sphi 0, %s44
      %s64 = sphi 0, %s64
      %s66 = sphi 0, %s64
      %s67 = sphi 0, %s66
      %s81 = sphi 0, %s67
      %s85 = sphi 0, %s85
      %s87 = sphi 0, %s85
      %s88 = sphi 0, %s87
      %s102 = sphi 0, %s88
      %s106 = sphi 0, %s106
      %s108 = sphi 0, %s106
      %s109 = sphi 0, %s108
      %s123 = sphi 0, %s109
      %s127 = sphi 0, %s127
      %s129 = sphi 0, %s127
      %s130 = sphi 0, %s129
      %s144 = sphi 0, %s130
      %s150 = sphi 0, %s152
      %s153 = sphi 0, %s150
      %s154 = sphi 0, %s153
      %s170 = sphi 0, %s154
    $region4: #{tpu_custom_call.1} parent=1 // loop_header_branch
      %19 = sbr.rel (%p17) target = $region8
    $region5: #{tpu_custom_call.1} parent=1 // loop_body
      %s21 = ssub.s32 %s16, 1
      %s22 = ssub.s32 %s16, 2
      %s29 = sadd.s32 1, %s24
      %p30 = scmp.ge.s32.totalorder %s29, 2
      %s31 = scalar_select %p30, 0, %s29
      %s32 = sadd.s32 1, %s23
      %s33 = scalar_select %p30, %s32, %s23
      %p34 = scmp.ge.s32.totalorder %s33, 1
      %s35 = scalar_select %p34, 0, %s33
      %s36 = ssub.s32 %s23, %s35
      %s37 = ssub.s32 %s24, %s31
      %s38 = sor.u32 %s36, %s37
      %p39 = scmp.eq.s32.totalorder %s38, 0
      %s41 = sadd.s32 %s40, 1
      %s42 = scalar_select %p39, %s40, %s41
      %p45 = pneg %p39
      %p46 = scmp.eq.s32.totalorder %s16, 1
      %p47 = por %p45, %p46
      %p48 = scmp.ne.s32.totalorder %s40, %s43
      %p49 = scmp.eq.s32.totalorder %s16, 0
      %p50 = por %p48, %p49
      %p51 = scmp.ne.s32.totalorder %s40, %s43
      %p52 = scmp.eq.s32.totalorder %s21, 1
      %p53 = por %p51, %p52
      %p54 = scmp.ne.s32.totalorder %s43, %s44
      %p55 = scmp.eq.s32.totalorder %s21, 0
      %p56 = por %p54, %p55
      %p57 = scmp.ne.s32.totalorder %s43, %s44
      %p58 = scmp.eq.s32.totalorder %s22, 1
      %p59 = por %p57, %p58
      %p61 = scmp.ne.s32.totalorder %s44, %s60
      %p62 = scmp.eq.s32.totalorder %s22, 0
      %p63 = por %p61, %p62
      %s65 = sadd.s32 %s64, 1
      %p68 = scmp.eq.s32.totalorder %s16, 1
      %p69 = scmp.ne.s32.totalorder %s64, %s66
      %p70 = scmp.eq.s32.totalorder %s16, 0
      %p71 = por %p69, %p70
      %p72 = scmp.ne.s32.totalorder %s64, %s66
      %p73 = scmp.eq.s32.totalorder %s21, 1
      %p74 = por %p72, %p73
      %p75 = scmp.ne.s32.totalorder %s66, %s67
      %p76 = scmp.eq.s32.totalorder %s21, 0
      %p77 = por %p75, %p76
      %p78 = scmp.ne.s32.totalorder %s66, %s67
      %p79 = scmp.eq.s32.totalorder %s22, 1
      %p80 = por %p78, %p79
      %p82 = scmp.ne.s32.totalorder %s67, %s81
      %p83 = scmp.eq.s32.totalorder %s22, 0
      %p84 = por %p82, %p83
      %s86 = sadd.s32 %s85, 1
      %p89 = scmp.eq.s32.totalorder %s16, 1
      %p90 = scmp.ne.s32.totalorder %s85, %s87
      %p91 = scmp.eq.s32.totalorder %s16, 0
      %p92 = por %p90, %p91
      %p93 = scmp.ne.s32.totalorder %s85, %s87
      %p94 = scmp.eq.s32.totalorder %s21, 1
      %p95 = por %p93, %p94
      %p96 = scmp.ne.s32.totalorder %s87, %s88
      %p97 = scmp.eq.s32.totalorder %s21, 0
      %p98 = por %p96, %p97
      %p99 = scmp.ne.s32.totalorder %s87, %s88
      %p100 = scmp.eq.s32.totalorder %s22, 1
      %p101 = por %p99, %p100
      %p103 = scmp.ne.s32.totalorder %s88, %s102
      %p104 = scmp.eq.s32.totalorder %s22, 0
      %p105 = por %p103, %p104
      %s107 = sadd.s32 %s106, 1
      %p110 = scmp.eq.s32.totalorder %s16, 1
      %p111 = scmp.ne.s32.totalorder %s106, %s108
      %p112 = scmp.eq.s32.totalorder %s16, 0
      %p113 = por %p111, %p112
      %p114 = scmp.ne.s32.totalorder %s106, %s108
      %p115 = scmp.eq.s32.totalorder %s21, 1
      %p116 = por %p114, %p115
      %p117 = scmp.ne.s32.totalorder %s108, %s109
      %p118 = scmp.eq.s32.totalorder %s21, 0
      %p119 = por %p117, %p118
      %p120 = scmp.ne.s32.totalorder %s108, %s109
      %p121 = scmp.eq.s32.totalorder %s22, 1
      %p122 = por %p120, %p121
      %p124 = scmp.ne.s32.totalorder %s109, %s123
      %p125 = scmp.eq.s32.totalorder %s22, 0
      %p126 = por %p124, %p125
      %s128 = sadd.s32 %s127, 1
      %p131 = scmp.eq.s32.totalorder %s16, 1
      %p132 = scmp.ne.s32.totalorder %s127, %s129
      %p133 = scmp.eq.s32.totalorder %s16, 0
      %p134 = por %p132, %p133
      %p135 = scmp.ne.s32.totalorder %s127, %s129
      %p136 = scmp.eq.s32.totalorder %s21, 1
      %p137 = por %p135, %p136
      %p138 = scmp.ne.s32.totalorder %s129, %s130
      %p139 = scmp.eq.s32.totalorder %s21, 0
      %p140 = por %p138, %p139
      %p141 = scmp.ne.s32.totalorder %s129, %s130
      %p142 = scmp.eq.s32.totalorder %s22, 1
      %p143 = por %p141, %p142
      %p145 = scmp.ne.s32.totalorder %s130, %s144
      %p146 = scmp.eq.s32.totalorder %s22, 0
      %p147 = por %p145, %p146
      %s148 = ssub.s32 %s23, %s35
      %p149 = scmp.eq.s32.totalorder %s148, 0
      %s151 = sadd.s32 %s150, 1
      %s152 = scalar_select %p149, %s150, %s151
      %p155 = pneg %p149
      %p156 = scmp.eq.s32.totalorder %s16, 1
      %p157 = por %p155, %p156
      %p158 = scmp.ne.s32.totalorder %s150, %s153
      %p159 = scmp.eq.s32.totalorder %s16, 0
      %p160 = por %p158, %p159
      %p161 = scmp.ne.s32.totalorder %s150, %s153
      %p162 = scmp.eq.s32.totalorder %s21, 1
      %p163 = por %p161, %p162
      %p164 = scmp.ne.s32.totalorder %s153, %s154
      %p165 = scmp.eq.s32.totalorder %s21, 0
      %p166 = por %p164, %p165
      %p167 = scmp.ne.s32.totalorder %s153, %s154
      %p168 = scmp.eq.s32.totalorder %s22, 1
      %p169 = por %p167, %p168
      %p171 = scmp.ne.s32.totalorder %s154, %s170
      %p172 = scmp.eq.s32.totalorder %s22, 0
      %p173 = por %p171, %p172
      %p174 = scmp.le.s32.totalorder 1, %s16
      %p175 = scmp.lt.s32.totalorder %s16, 3
      %p176 = pnand %p174, %p175
      %p177 = pneg %p176
      // Predicated region
      $region9: #{tpu_custom_call.1} parent=5 // pred_check
        _
      $region10: #{tpu_custom_call.1} parent=5 // pred_check_branch
        %179 = sbr.rel (%p176) target = $region12
      $region11: #{tpu_custom_call.1} parent=5 // pred_region
        %s180 = ssub.s32 %s16, 1
        // Predicated region
        $region13: #{tpu_custom_call.1} parent=11 // pred_check
          %p181 = pneg %p77
        $region14: #{tpu_custom_call.1} parent=11 // pred_check_branch
          %183 = sbr.rel (%p181) target = $region16
        $region15: #{tpu_custom_call.1} parent=11 // pred_region
          %185 = vsyncadd [#allocation7], 0
          %s187 = sshll.u32 %s1, 4
          %s188 = int_to_ptr.hbm [resolvable:$true] %s187
          %s189 = sshll.u32 [#allocation6], 4
          %s190 = int_to_ptr.vmem [resolvable:$true] %s189
          %192 = dma.hbm_to_vmem [thread:$0]  %s188, 64, %s190, [#allocation7]
        $region16: #{tpu_custom_call.1} parent=11 // pred_fallthru
          _
        // Predicated region
        $region17: #{tpu_custom_call.1} parent=11 // pred_check
          %p193 = pneg %p98
        $region18: #{tpu_custom_call.1} parent=11 // pred_check_branch
          %195 = sbr.rel (%p193) target = $region20
        $region19: #{tpu_custom_call.1} parent=11 // pred_region
          _
        $region20: #{tpu_custom_call.1} parent=11 // pred_fallthru
          _
        // Predicated region
        $region21: #{tpu_custom_call.1} parent=11 // pred_check
          %p196 = pneg %p119
        $region22: #{tpu_custom_call.1} parent=11 // pred_check_branch
          %198 = sbr.rel (%p196) target = $region24
        $region23: #{tpu_custom_call.1} parent=11 // pred_region
          _
        $region24: #{tpu_custom_call.1} parent=11 // pred_fallthru
          _
        // Predicated region
        $region25: #{tpu_custom_call.1} parent=11 // pred_check
          %p199 = pneg %p140
        $region26: #{tpu_custom_call.1} parent=11 // pred_check_branch
          %201 = sbr.rel (%p199) target = $region28
        $region27: #{tpu_custom_call.1} parent=11 // pred_region
          %203 = vsyncadd [#allocation7], 0
          %s204 = sshll.u32 %s4, 4
          %s205 = int_to_ptr.hbm [resolvable:$true] %s204
          %s206 = sshll.u32 [#allocation8], 4
          %s207 = int_to_ptr.vmem [resolvable:$true] %s206
          %212 = dma.hbm_to_vmem [thread:$0]  %s205, 1024, %s207, [#allocation7], 64, 64, 4
        $region28: #{tpu_custom_call.1} parent=11 // pred_fallthru
          _
      $region12: #{tpu_custom_call.1} parent=5 // pred_fallthru
        _
      %p213 = scmp.lt.s32.totalorder %s16, 2
      // Predicated region
      $region29: #{tpu_custom_call.1} parent=5 // pred_check
        %p214 = pneg %p213
      $region30: #{tpu_custom_call.1} parent=5 // pred_check_branch
        %216 = sbr.rel (%p214) target = $region32
      $region31: #{tpu_custom_call.1} parent=5 // pred_region
        // Predicated region
        $region33: #{tpu_custom_call.1} parent=31 // pred_check
          %p217 = pneg %p50
        $region34: #{tpu_custom_call.1} parent=31 // pred_check_branch
          %219 = sbr.rel (%p217) target = $region36
        $region35: #{tpu_custom_call.1} parent=31 // pred_region
          %s220 = sand.u32 %s40, 1
          %s221 = scalar_lea.sflag [#allocation4], %s220
          %s222 = sand.u32 %s40, 1
          %s223 = smul.addr %s222, 32
          %s224 = scalar_lea.vmem [#allocation3], %s223
          %s225 = smul.u32 2, %s23
          %227 = vsyncadd %s221, 0
          %s228 = smul.addr %s225, 2
          %s229 = sadd.s32 %s24, %s228
          %s230 = smul.addr %s229, 4
          %s231 = scalar_lea.hbm %s0, %s230
          %s232 = sshll.u32 %s231, 4
          %s233 = int_to_ptr.hbm [resolvable:$true] %s232
          %s234 = sshll.u32 %s224, 4
          %s235 = int_to_ptr.vmem [resolvable:$true] %s234
          %240 = dma.hbm_to_vmem [thread:$0]  %s233, 512, %s235, %s221, 128, 64, 4
        $region36: #{tpu_custom_call.1} parent=31 // pred_fallthru
          _
      $region32: #{tpu_custom_call.1} parent=5 // pred_fallthru
        _
      %p241 = scmp.le.s32.totalorder 1, %s16
      %p242 = scmp.lt.s32.totalorder %s16, 3
      %p243 = pnand %p241, %p242
      %p244 = pneg %p243
      // Predicated region
      $region37: #{tpu_custom_call.1} parent=5 // pred_check
        _
      $region38: #{tpu_custom_call.1} parent=5 // pred_check_branch
        %246 = sbr.rel (%p243) target = $region40
      $region39: #{tpu_custom_call.1} parent=5 // pred_region
        %s247 = ssub.s32 %s16, 1
        %s248 = sand.u32 %s43, 1
        %s249 = scalar_lea.sflag [#allocation4], %s248
        %s250 = sand.u32 %s43, 1
        %s251 = smul.addr %s250, 32
        %s252 = scalar_lea.vmem [#allocation3], %s251
        // Predicated region
        $region41: #{tpu_custom_call.1} parent=39 // pred_check
          %p253 = pneg %p56
        $region42: #{tpu_custom_call.1} parent=39 // pred_check_branch
          %255 = sbr.rel (%p253) target = $region44
        $region43: #{tpu_custom_call.1} parent=39 // pred_region
          %257 = dma.done %s249, 512
        $region44: #{tpu_custom_call.1} parent=39 // pred_fallthru
          _
        // Predicated region
        $region45: #{tpu_custom_call.1} parent=39 // pred_check
          %p258 = pneg %p77
        $region46: #{tpu_custom_call.1} parent=39 // pred_check_branch
          %260 = sbr.rel (%p258) target = $region48
        $region47: #{tpu_custom_call.1} parent=39 // pred_region
          %262 = dma.done [#allocation7], 64
        $region48: #{tpu_custom_call.1} parent=39 // pred_fallthru
          _
        // Predicated region
        $region49: #{tpu_custom_call.1} parent=39 // pred_check
          %p263 = pneg %p140
        $region50: #{tpu_custom_call.1} parent=39 // pred_check_branch
          %265 = sbr.rel (%p263) target = $region52
        $region51: #{tpu_custom_call.1} parent=39 // pred_region
          %267 = dma.done [#allocation7], 1024
        $region52: #{tpu_custom_call.1} parent=39 // pred_fallthru
          _
        %s268 = sand.u32 %s43, 1
        %s269 = scalar_lea.sflag [#allocation4], %s268
        %s270 = sand.u32 %s43, 1
        %s271 = smul.addr %s270, 32
        %s272 = scalar_lea.vmem [#allocation3], %s271
        %p273 = pneg %p56
        %p274 = pneg %p53
        %p275 = pneg %p77
        %p276 = pneg %p74
        %p277 = pneg %p98
        %p278 = pneg %p95
        %p279 = pneg %p119
        %p280 = pneg %p116
        %p281 = pneg %p140
        %p282 = pneg %p137
        %p283 = pneg %p166
        %p284 = pneg %p163
        %s285 = smul.u32 2, %s25
        %s286 = smul.u32 2, %s25
        %v287 = vld [vmem:[%s252] sm:$0xf]
        %v288 = vld [vmem:[%s252 + $0x4] sm:$0xf]
        %v289 = vld [vmem:[%s252 + $0x8] sm:$0xf]
        %v290 = vld [vmem:[%s252 + $0xc] sm:$0xf]
        %v291 = vld [vmem:[%s252 + $0x10] sm:$0xf]
        %v292 = vld [vmem:[%s252 + $0x14] sm:$0xf]
        %v293 = vld [vmem:[%s252 + $0x18] sm:$0xf]
        %v294 = vld [vmem:[%s252 + $0x1c] sm:$0xf]
        %v295 = vunpack.c.l.bf16 %v287
        %v296 = vunpack.c.l.bf16 %v288
        %v297 = vunpack.c.l.bf16 %v289
        %v298 = vunpack.c.l.bf16 %v290
        %v299 = vunpack.c.l.bf16 %v291
        %v300 = vunpack.c.l.bf16 %v292
        %v301 = vunpack.c.l.bf16 %v293
        %v302 = vunpack.c.l.bf16 %v294
        %303 = vadd.xlane.f32.xlu0 %v295
        %v304 = vpop.xlane.xlu0 %303
        %305 = vadd.xlane.f32.xlu0 %v296
        %v306 = vpop.xlane.xlu0 %305
        %307 = vadd.xlane.f32.xlu0 %v297
        %v308 = vpop.xlane.xlu0 %307
        %309 = vadd.xlane.f32.xlu0 %v298
        %v310 = vpop.xlane.xlu0 %309
        %311 = vadd.xlane.f32.xlu0 %v299
        %v312 = vpop.xlane.xlu0 %311
        %313 = vadd.xlane.f32.xlu0 %v300
        %v314 = vpop.xlane.xlu0 %313
        %315 = vadd.xlane.f32.xlu0 %v301
        %v316 = vpop.xlane.xlu0 %315
        %317 = vadd.xlane.f32.xlu0 %v302
        %v318 = vpop.xlane.xlu0 %317
        %p319 = scmp.eq.s32.totalorder %s26, 0
        // Predicated region
        $region53: #{tpu_custom_call.1} parent=39 // pred_check
          %p320 = pneg %p319
        $region54: #{tpu_custom_call.1} parent=39 // pred_check_branch
          %322 = sbr.rel (%p320) target = $region56
        $region55: #{tpu_custom_call.1} parent=39 // pred_region
          %vm323 = vcmask 7168
          %324 = vst.msk [vmem:[#allocation2] sm:$0xff] %vm323, %v304
          %325 = vst.msk [vmem:[#allocation2 + $0x8] sm:$0xff] %vm323, %v306
          %326 = vst.msk [vmem:[#allocation2 + $0x10] sm:$0xff] %vm323, %v308
          %327 = vst.msk [vmem:[#allocation2 + $0x18] sm:$0xff] %vm323, %v310
          %328 = vst.msk [vmem:[#allocation2 + $0x20] sm:$0xff] %vm323, %v312
          %329 = vst.msk [vmem:[#allocation2 + $0x28] sm:$0xff] %vm323, %v314
          %330 = vst.msk [vmem:[#allocation2 + $0x30] sm:$0xff] %vm323, %v316
          %331 = vst.msk [vmem:[#allocation2 + $0x38] sm:$0xff] %vm323, %v318
        $region56: #{tpu_custom_call.1} parent=39 // pred_fallthru
          _
        %p332 = scmp.gt.s32.totalorder %s26, 0
        // Predicated region
        $region57: #{tpu_custom_call.1} parent=39 // pred_check
          %p333 = pneg %p332
        $region58: #{tpu_custom_call.1} parent=39 // pred_check_branch
          %335 = sbr.rel (%p333) target = $region60
        $region59: #{tpu_custom_call.1} parent=39 // pred_region
          %v336 = vld [vmem:[#allocation2] sm:$0xff]
          %v337 = vld [vmem:[#allocation2 + $0x8] sm:$0xff]
          %v338 = vld [vmem:[#allocation2 + $0x10] sm:$0xff]
          %v339 = vld [vmem:[#allocation2 + $0x18] sm:$0xff]
          %v340 = vld [vmem:[#allocation2 + $0x20] sm:$0xff]
          %v341 = vld [vmem:[#allocation2 + $0x28] sm:$0xff]
          %v342 = vld [vmem:[#allocation2 + $0x30] sm:$0xff]
          %v343 = vld [vmem:[#allocation2 + $0x38] sm:$0xff]
          %v344 = vadd.f32 %v336, %v304
          %v345 = vadd.f32 %v337, %v306
          %v346 = vadd.f32 %v338, %v308
          %v347 = vadd.f32 %v339, %v310
          %v348 = vadd.f32 %v340, %v312
          %v349 = vadd.f32 %v341, %v314
          %v350 = vadd.f32 %v342, %v316
          %v351 = vadd.f32 %v343, %v318
          %vm352 = vcmask 7168
          %353 = vst.msk [vmem:[#allocation2] sm:$0xff] %vm352, %v344
          %354 = vst.msk [vmem:[#allocation2 + $0x8] sm:$0xff] %vm352, %v345
          %355 = vst.msk [vmem:[#allocation2 + $0x10] sm:$0xff] %vm352, %v346
          %356 = vst.msk [vmem:[#allocation2 + $0x18] sm:$0xff] %vm352, %v347
          %357 = vst.msk [vmem:[#allocation2 + $0x20] sm:$0xff] %vm352, %v348
          %358 = vst.msk [vmem:[#allocation2 + $0x28] sm:$0xff] %vm352, %v349
          %359 = vst.msk [vmem:[#allocation2 + $0x30] sm:$0xff] %vm352, %v350
          %360 = vst.msk [vmem:[#allocation2 + $0x38] sm:$0xff] %vm352, %v351
        $region60: #{tpu_custom_call.1} parent=39 // pred_fallthru
          _
        %p361 = scmp.eq.s32.totalorder %s26, 1
        // Predicated region
        $region61: #{tpu_custom_call.1} parent=39 // pred_check
          %p362 = pneg %p361
        $region62: #{tpu_custom_call.1} parent=39 // pred_check_branch
          %364 = sbr.rel (%p362) target = $region64
        $region63: #{tpu_custom_call.1} parent=39 // pred_region
          %v365 = vld [vmem:[#allocation2] sm:$0xff]
          %v366 = vld [vmem:[#allocation2 + $0x8] sm:$0xff]
          %v367 = vmul.f32 %v365, 0.00390625
          %v368 = vmul.f32 %v366, 0.00390625
          %v369 = vld [vmem:[#allocation6] sm:$0x1]
          %371 = vset.pattern.permute.xlu0 0
          %372 = vperm.xlu0 %371, %v367
          %v373 = vpop.permute.xlu0 %372
          %376 = vset.pattern.permute.xlu0 0
          %377 = vperm.xlu0 %376, %v368
          %v378 = vpop.permute.xlu0 %377
          %v380 = vperm.slane %v369, 0
          %v381 = vmul.f32 %v373, %v380
          %v382 = vmul.f32 %v378, %v380
          %v383 = vadd.f32 %v381, 0.0
          %v384 = vadd.f32 %v382, 0.0
          %s385 = scalar_lea.vmem [#allocation2], 16
          %v386 = vld [vmem:[%s385] sm:$0xff]
          %v387 = vld [vmem:[%s385 + $0x8] sm:$0xff]
          %v388 = vmul.f32 %v386, 0.00390625
          %v389 = vmul.f32 %v387, 0.00390625
          %v390 = vld [vmem:[#allocation6 + $0x1] sm:$0x1]
          %392 = vset.pattern.permute.xlu0 0
          %393 = vperm.xlu0 %392, %v388
          %v394 = vpop.permute.xlu0 %393
          %397 = vset.pattern.permute.xlu0 0
          %398 = vperm.xlu0 %397, %v389
          %v399 = vpop.permute.xlu0 %398
          %v401 = vperm.slane %v390, 0
          %v402 = vmul.f32 %v394, %v401
          %v403 = vmul.f32 %v399, %v401
          %v404 = vadd.f32 %v383, %v402
          %v405 = vadd.f32 %v384, %v403
          %s406 = scalar_lea.vmem [#allocation2], 32
          %v407 = vld [vmem:[%s406] sm:$0xff]
          %v408 = vld [vmem:[%s406 + $0x8] sm:$0xff]
          %v409 = vmul.f32 %v407, 0.00390625
          %v410 = vmul.f32 %v408, 0.00390625
          %v411 = vld [vmem:[#allocation6 + $0x2] sm:$0x1]
          %413 = vset.pattern.permute.xlu0 0
          %414 = vperm.xlu0 %413, %v409
          %v415 = vpop.permute.xlu0 %414
          %418 = vset.pattern.permute.xlu0 0
          %419 = vperm.xlu0 %418, %v410
          %v420 = vpop.permute.xlu0 %419
          %v422 = vperm.slane %v411, 0
          %v423 = vmul.f32 %v415, %v422
          %v424 = vmul.f32 %v420, %v422
          %v425 = vadd.f32 %v404, %v423
          %v426 = vadd.f32 %v405, %v424
          %s427 = scalar_lea.vmem [#allocation2], 48
          %v428 = vld [vmem:[%s427] sm:$0xff]
          %v429 = vld [vmem:[%s427 + $0x8] sm:$0xff]
          %v430 = vmul.f32 %v428, 0.00390625
          %v431 = vmul.f32 %v429, 0.00390625
          %v432 = vld [vmem:[#allocation6 + $0x3] sm:$0x1]
          %434 = vset.pattern.permute.xlu0 0
          %435 = vperm.xlu0 %434, %v430
          %v436 = vpop.permute.xlu0 %435
          %439 = vset.pattern.permute.xlu0 0
          %440 = vperm.xlu0 %439, %v431
          %v441 = vpop.permute.xlu0 %440
          %v443 = vperm.slane %v432, 0
          %v444 = vmul.f32 %v436, %v443
          %v445 = vmul.f32 %v441, %v443
          %v446 = vadd.f32 %v425, %v444
          %v447 = vadd.f32 %v426, %v445
          %v448 = vmax.f32 %v446, 0.0
          %v449 = vmax.f32 %v447, 0.0
          %450 = vadd.xlane.f32.xlu0 %v448
          %v451 = vpop.xlane.xlu0 %450
          %452 = vadd.xlane.f32.xlu0 %v449
          %v453 = vpop.xlane.xlu0 %452
          %v454 = vmul.f32 %v451, 0.03125
          %v455 = vmul.f32 %v453, 0.03125
          %v456 = vsub.f32 %v448, %v454
          %v457 = vsub.f32 %v449, %v455
          %v458 = vmul.f32 %v456, %v456
          %v459 = vmul.f32 %v457, %v457
          %460 = vadd.xlane.f32.xlu0 %v458
          %v461 = vpop.xlane.xlu0 %460
          %462 = vadd.xlane.f32.xlu0 %v459
          %v463 = vpop.xlane.xlu0 %462
          %v464 = vmul.f32 %v454, %v454
          %v465 = vmul.f32 %v455, %v455
          %v466 = vmul.f32 %v464, 96.0
          %v467 = vmul.f32 %v465, 96.0
          %v468 = vsub.f32 %v461, %v466
          %v469 = vsub.f32 %v463, %v467
          %v470 = vmul.f32 %v468, 0.03125
          %v471 = vmul.f32 %v469, 0.03125
          %v472 = vmax.f32 %v470, 0.0
          %v473 = vmax.f32 %v471, 0.0
          %v474 = vadd.f32 %v472, 1e-05
          %v475 = vadd.f32 %v473, 1e-05
          %v476 = vrsqrt.pop %v474
          %v477 = vmul.f32 %v476, %v474
          %v478 = vmul.f32 %v477, %v476
          %v479 = vmul.f32 0.5, %v478
          %v480 = vsub.f32 1.5, %v479
          %v481 = vmul.f32 %v476, %v480
          %vm482 = vweird.f32 %v474
          %vm483 = vweird.f32 %v476
          %vm484 = vmor %vm482, %vm483
          %v485 = vsel %vm484, %v476, %v481
          %v486 = vrsqrt.pop %v475
          %v487 = vmul.f32 %v486, %v475
          %v488 = vmul.f32 %v487, %v486
          %v489 = vmul.f32 0.5, %v488
          %v490 = vsub.f32 1.5, %v489
          %v491 = vmul.f32 %v486, %v490
          %vm492 = vweird.f32 %v475
          %vm493 = vweird.f32 %v486
          %vm494 = vmor %vm492, %vm493
          %v495 = vsel %vm494, %v486, %v491
          %v496 = vmul.f32 %v456, %v485
          %v497 = vmul.f32 %v457, %v495
          %v498 = vld [vmem:[%s2] sm:$0x1]
          %v500 = vperm.slane %v498, 0
          %v502 = vmul.f32 %v496, %v500
          %v503 = vmul.f32 %v497, %v500
          %v504 = vld [vmem:[%s3] sm:$0x1]
          %v506 = vperm.slane %v504, 0
          %v508 = vadd.f32 %v502, %v506
          %v509 = vadd.f32 %v503, %v506
          %v510 = vpack.c.bf16 %v509, %v508
          %v511 = vld [vmem:[#allocation8] sm:$0xf]
          %v512 = vld [vmem:[#allocation8 + $0x4] sm:$0xf]
          %v513 = vld [vmem:[#allocation8 + $0x8] sm:$0xf]
          %v514 = vld [vmem:[#allocation8 + $0xc] sm:$0xf]
          %v515 = vld [vmem:[#allocation8 + $0x10] sm:$0xf]
          %v516 = vld [vmem:[#allocation8 + $0x14] sm:$0xf]
          %v517 = vld [vmem:[#allocation8 + $0x18] sm:$0xf]
          %v518 = vld [vmem:[#allocation8 + $0x1c] sm:$0xf]
          %v519 = vld [vmem:[#allocation8 + $0x20] sm:$0xf]
          %v520 = vld [vmem:[#allocation8 + $0x24] sm:$0xf]
          %v521 = vld [vmem:[#allocation8 + $0x28] sm:$0xf]
          %v522 = vld [vmem:[#allocation8 + $0x2c] sm:$0xf]
          %v523 = vld [vmem:[#allocation8 + $0x30] sm:$0xf]
          %v524 = vld [vmem:[#allocation8 + $0x34] sm:$0xf]
          %v525 = vld [vmem:[#allocation8 + $0x38] sm:$0xf]
          %v526 = vld [vmem:[#allocation8 + $0x3c] sm:$0xf]
          %v543 = vunpack.c.l.b16 %v511
          %v544 = vunpack.c.l.b16 %v512
          %v545 = vunpack.c.l.b16 %v513
          %v546 = vunpack.c.l.b16 %v514
          %v547 = vunpack.c.l.b16 %v515
          %v548 = vunpack.c.l.b16 %v516
          %v549 = vunpack.c.l.b16 %v517
          %v550 = vunpack.c.l.b16 %v518
          %v551 = vunpack.c.l.b16 %v519
          %v552 = vunpack.c.l.b16 %v520
          %v553 = vunpack.c.l.b16 %v521
          %v554 = vunpack.c.l.b16 %v522
          %v555 = vunpack.c.l.b16 %v523
          %v556 = vunpack.c.l.b16 %v524
          %v557 = vunpack.c.l.b16 %v525
          %v558 = vunpack.c.l.b16 %v526
          %v559 = vpack.c.b16 %v544, %v543
          %v560 = vpack.c.b16 %v546, %v545
          %v561 = vpack.c.b16 %v548, %v547
          %v562 = vpack.c.b16 %v550, %v549
          %v563 = vpack.c.b16 %v552, %v551
          %v564 = vpack.c.b16 %v554, %v553
          %v565 = vpack.c.b16 %v556, %v555
          %v566 = vpack.c.b16 %v558, %v557
          %575 = vmatpush.bf16.msra.mxu0 %v566
          %576 = vmatpush.bf16.msra.mxu0 %v565
          %577 = vmatpush.bf16.msra.mxu0 %v564
          %578 = vmatpush.bf16.msra.mxu0 %v563
          %579 = vmatpush.bf16.msra.mxu0 %v562
          %580 = vmatpush.bf16.msra.mxu0 %v561
          %581 = vmatpush.bf16.msra.mxu0 %v560
          %582 = vmatpush.bf16.msra.mxu0 %v559
          %583 = vmatmul.bf16.gmra.mxu0 %v510
          %v584 = vpop.f32.mrf.mxu0
          %v585 = vadd.f32 0.0, %v584
          %v586 = vpop.f32.mrf.mxu0
          %v587 = vadd.f32 0.0, %v586
          %588 = vdwg.mxu0
          %v589 = vmul.f32 %v585, %v585
          %v590 = vmul.f32 %v587, %v587
          %591 = vadd.xlane.f32.xlu0 %v589
          %v592 = vpop.xlane.xlu0 %591
          %593 = vadd.xlane.f32.xlu0 %v590
          %v594 = vpop.xlane.xlu0 %593
          %v595 = vmax.f32 %v592, 1e-24
          %v596 = vmax.f32 %v594, 1e-24
          %v597 = vrsqrt.pop %v595
          %v598 = vmul.f32 %v597, %v595
          %v599 = vmul.f32 %v598, %v597
          %v600 = vmul.f32 0.5, %v599
          %v601 = vsub.f32 1.5, %v600
          %v602 = vmul.f32 %v597, %v601
          %vm603 = vweird.f32 %v595
          %vm604 = vweird.f32 %v597
          %vm605 = vmor %vm603, %vm604
          %v606 = vsel %vm605, %v597, %v602
          %v607 = vrsqrt.pop %v596
          %v608 = vmul.f32 %v607, %v596
          %v609 = vmul.f32 %v608, %v607
          %v610 = vmul.f32 0.5, %v609
          %v611 = vsub.f32 1.5, %v610
          %v612 = vmul.f32 %v607, %v611
          %vm613 = vweird.f32 %v596
          %vm614 = vweird.f32 %v607
          %vm615 = vmor %vm613, %vm614
          %v616 = vsel %vm615, %v607, %v612
          %v617 = vmul.f32 %v585, %v606
          %v618 = vmul.f32 %v587, %v616
          %619 = vst [vmem:[#allocation9] sm:$0xff] %v617
          %620 = vst [vmem:[#allocation9 + $0x8] sm:$0xff] %v618
        $region64: #{tpu_custom_call.1} parent=39 // pred_fallthru
          _
        // Predicated region
        $region65: #{tpu_custom_call.1} parent=39 // pred_check
          %p621 = pneg %p163
        $region66: #{tpu_custom_call.1} parent=39 // pred_check_branch
          %623 = sbr.rel (%p621) target = $region68
        $region67: #{tpu_custom_call.1} parent=39 // pred_region
          %s624 = smul.u32 2, %s25
          %626 = vsyncadd [#allocation5], 0
          %s627 = smul.addr %s624, 8
          %s628 = scalar_lea.hbm %s5, %s627
          %s629 = sshll.u32 [#allocation9], 4
          %s630 = int_to_ptr.vmem [resolvable:$true] %s629
          %s631 = sshll.u32 %s628, 4
          %s632 = int_to_ptr.hbm [resolvable:$true] %s631
          %637 = dma.vmem_to_hbm [thread:$0]  %s630, 256, %s632, [#allocation5], 128, 128, 8
        $region68: #{tpu_custom_call.1} parent=39 // pred_fallthru
          _
        // Predicated region
        $region69: #{tpu_custom_call.1} parent=39 // pred_check
          %p638 = pneg %p163
        $region70: #{tpu_custom_call.1} parent=39 // pred_check_branch
          %640 = sbr.rel (%p638) target = $region72
        $region71: #{tpu_custom_call.1} parent=39 // pred_region
          %642 = dma.done [#allocation5], 256
        $region72: #{tpu_custom_call.1} parent=39 // pred_fallthru
          _
      $region40: #{tpu_custom_call.1} parent=5 // pred_fallthru
        _
      %p643 = scmp.le.s32.totalorder 2, %s16
      // Predicated region
      $region73: #{tpu_custom_call.1} parent=5 // pred_check
        %p644 = pneg %p643
      $region74: #{tpu_custom_call.1} parent=5 // pred_check_branch
        %646 = sbr.rel (%p644) target = $region76
      $region75: #{tpu_custom_call.1} parent=5 // pred_region
        %s647 = ssub.s32 %s16, 2
      $region76: #{tpu_custom_call.1} parent=5 // pred_fallthru
        _
    $region6: #{tpu_custom_call.1} parent=1 // loop_footer
      %s20 = sadd.s32 1, %s16
    $region7: #{tpu_custom_call.1} parent=1 // loop_footer_branch
      %15 = sbr.rel target = $region3
    $region8: #{tpu_custom_call.1} parent=1 // loop_exit
      _
    %648 = vsyncpa [#allocation4], 1
    %s649 = scalar_lea.sflag [#allocation4], 1
    %650 = vsyncpa %s649, 1
    %651 = vsyncpa [#allocation7], 1
    %652 = vsyncpa [#allocation5], 1
    %s653 = scalar_lea.sflag [#allocation5], 1
    %654 = vsyncpa %s653, 1

// kernel: tpu_custom_call.1
$region0: #{tpu_custom_call.1}
  #allocation0 [shape = 'u32[]', space=smem, size = 0x4, offset = 0x4, fixed_abs, tag = 'smem constant byte address 0x4 - core index']
  #allocation1 [shape = 'u32[72,128]{1,0:T(1,128)}', space=vmem, size = 0x9000, scoped, tag = 'internal scratch']
  #allocation2 [shape = 'f32[4,16,1]{2,1,0:T(8,128)}', space=vmem, size = 0x8000, scoped, tag = 'scratch operand']
  %s0 = inlined_call_operand.hbm [shape: bf16[4,16,256], index: 0, kind: input, shape index: {}]
  %s1 = inlined_call_operand.hbm [shape: f32[4,128], index: 1, kind: input, shape index: {}]
  %s2 = inlined_call_operand.vmem [shape: f32[1,128], index: 2, kind: input, shape index: {}]
  %s3 = inlined_call_operand.vmem [shape: f32[1,128], index: 3, kind: input, shape index: {}]
  %s4 = inlined_call_operand.hbm [shape: bf16[128,128], index: 4, kind: input, shape index: {}]
  %s5 = inlined_call_operand.hbm [shape: f32[16,128], index: 5, kind: output, shape index: {}]
  %s6 = sld [smem:[#allocation0]]
  $region77: #{tpu_custom_call.1} parent=0
    _
  %s8 = ssub.s32 1, %s6
  %s9 = scalar_select 0, %s8, %s6
  $region1: #{tpu_custom_call.1} parent=0
    #allocation3 [shape = 'u8[32768]{0}', space=vmem, size = 0x8000, scoped, tag = 'input window, operand 0']
    #allocation4 [shape = 's32[2]{0}', space=sflag, size = 0x8, scoped, tag = 'scoped memory for tpu_custom_call.1']
    #allocation5 [shape = 's32[2]{0}', space=sflag, size = 0x8, scoped, tag = 'scoped memory for tpu_custom_call.1']
    #allocation6 [shape = 'u8[2048]{0}', space=vmem, size = 0x800, scoped, tag = 'input window, operand 1, single buffered']
    #allocation7 [shape = 's32[1]{0}', space=sflag, size = 0x4, scoped, tag = 'scoped memory for tpu_custom_call.1']
    #allocation8 [shape = 'u8[32768]{0}', space=vmem, size = 0x8000, scoped, tag = 'input window, operand 4, single buffered']
    #allocation9 [shape = 'u8[8192]{0}', space=vmem, size = 0x2000, scoped, tag = 'output window, operand 0, single buffered']
    %10 = vsyncpa [#allocation4], 0
    %s11 = scalar_lea.sflag [#allocation4], 1
    %12 = vsyncpa %s11, 0
    %13 = vsyncpa [#allocation7], 0
    %14 = vsyncpa [#allocation5], 0
    loop: start=0, step=1, limit=4
    $region2: #{tpu_custom_call.1} parent=1 // loop_pre_header
      _
    $region3: #{tpu_custom_call.1} parent=1 // loop_header
      %s16 = sphi 0, %s20
      %p17 = scmp.ge.s32.totalorder %s16, 4
      %s23 = sphi 0, %s35
      %s24 = sphi 0, %s31
      %s25 = sphi 0, %s23
      %s26 = sphi 0, %s24
      %s27 = sphi 0, %s25
      %s28 = sphi 0, %s26
      %s40 = sphi 0, %s42
      %s43 = sphi 0, %s40
      %s44 = sphi 0, %s43
      %s60 = sphi 0, %s44
      %s64 = sphi 0, %s64
      %s66 = sphi 0, %s64
      %s67 = sphi 0, %s66
      %s81 = sphi 0, %s67
      %s85 = sphi 0, %s85
      %s87 = sphi 0, %s85
      %s88 = sphi 0, %s87
      %s102 = sphi 0, %s88
      %s106 = sphi 0, %s106
      %s108 = sphi 0, %s106
      %s109 = sphi 0, %s108
      %s123 = sphi 0, %s109
      %s127 = sphi 0, %s127
      %s129 = sphi 0, %s127
      %s130 = sphi 0, %s129
      %s144 = sphi 0, %s130
      %s150 = sphi 0, %s152
      %s153 = sphi 0, %s150
      %s154 = sphi 0, %s153
      %s170 = sphi 0, %s154
    $region4: #{tpu_custom_call.1} parent=1 // loop_header_branch
      %19 = sbr.rel (%p17) target = $region8
    $region5: #{tpu_custom_call.1} parent=1 // loop_body
      %s21 = ssub.s32 %s16, 1
      %s22 = ssub.s32 %s16, 2
      %s29 = sadd.s32 1, %s24
      %p30 = scmp.ge.s32.totalorder %s29, 2
      %s31 = scalar_select %p30, 0, %s29
      %s32 = sadd.s32 1, %s23
      %s33 = scalar_select %p30, %s32, %s23
      %p34 = scmp.ge.s32.totalorder %s33, 1
      %s35 = scalar_select %p34, 0, %s33
      %s36 = ssub.s32 %s23, %s35
      %s37 = ssub.s32 %s24, %s31
      %s38 = sor.u32 %s36, %s37
      %p39 = scmp.eq.s32.totalorder %s38, 0
      %s41 = sadd.s32 %s40, 1
      %s42 = scalar_select %p39, %s40, %s41
      %p45 = pneg %p39
      %p46 = scmp.eq.s32.totalorder %s16, 1
      %p47 = por %p45, %p46
      %p48 = scmp.ne.s32.totalorder %s40, %s43
      %p49 = scmp.eq.s32.totalorder %s16, 0
      %p50 = por %p48, %p49
      %p51 = scmp.ne.s32.totalorder %s40, %s43
      %p52 = scmp.eq.s32.totalorder %s21, 1
      %p53 = por %p51, %p52
      %p54 = scmp.ne.s32.totalorder %s43, %s44
      %p55 = scmp.eq.s32.totalorder %s21, 0
      %p56 = por %p54, %p55
      %p57 = scmp.ne.s32.totalorder %s43, %s44
      %p58 = scmp.eq.s32.totalorder %s22, 1
      %p59 = por %p57, %p58
      %p61 = scmp.ne.s32.totalorder %s44, %s60
      %p62 = scmp.eq.s32.totalorder %s22, 0
      %p63 = por %p61, %p62
      %s65 = sadd.s32 %s64, 1
      %p68 = scmp.eq.s32.totalorder %s16, 1
      %p69 = scmp.ne.s32.totalorder %s64, %s66
      %p70 = scmp.eq.s32.totalorder %s16, 0
      %p71 = por %p69, %p70
      %p72 = scmp.ne.s32.totalorder %s64, %s66
      %p73 = scmp.eq.s32.totalorder %s21, 1
      %p74 = por %p72, %p73
      %p75 = scmp.ne.s32.totalorder %s66, %s67
      %p76 = scmp.eq.s32.totalorder %s21, 0
      %p77 = por %p75, %p76
      %p78 = scmp.ne.s32.totalorder %s66, %s67
      %p79 = scmp.eq.s32.totalorder %s22, 1
      %p80 = por %p78, %p79
      %p82 = scmp.ne.s32.totalorder %s67, %s81
      %p83 = scmp.eq.s32.totalorder %s22, 0
      %p84 = por %p82, %p83
      %s86 = sadd.s32 %s85, 1
      %p89 = scmp.eq.s32.totalorder %s16, 1
      %p90 = scmp.ne.s32.totalorder %s85, %s87
      %p91 = scmp.eq.s32.totalorder %s16, 0
      %p92 = por %p90, %p91
      %p93 = scmp.ne.s32.totalorder %s85, %s87
      %p94 = scmp.eq.s32.totalorder %s21, 1
      %p95 = por %p93, %p94
      %p96 = scmp.ne.s32.totalorder %s87, %s88
      %p97 = scmp.eq.s32.totalorder %s21, 0
      %p98 = por %p96, %p97
      %p99 = scmp.ne.s32.totalorder %s87, %s88
      %p100 = scmp.eq.s32.totalorder %s22, 1
      %p101 = por %p99, %p100
      %p103 = scmp.ne.s32.totalorder %s88, %s102
      %p104 = scmp.eq.s32.totalorder %s22, 0
      %p105 = por %p103, %p104
      %s107 = sadd.s32 %s106, 1
      %p110 = scmp.eq.s32.totalorder %s16, 1
      %p111 = scmp.ne.s32.totalorder %s106, %s108
      %p112 = scmp.eq.s32.totalorder %s16, 0
      %p113 = por %p111, %p112
      %p114 = scmp.ne.s32.totalorder %s106, %s108
      %p115 = scmp.eq.s32.totalorder %s21, 1
      %p116 = por %p114, %p115
      %p117 = scmp.ne.s32.totalorder %s108, %s109
      %p118 = scmp.eq.s32.totalorder %s21, 0
      %p119 = por %p117, %p118
      %p120 = scmp.ne.s32.totalorder %s108, %s109
      %p121 = scmp.eq.s32.totalorder %s22, 1
      %p122 = por %p120, %p121
      %p124 = scmp.ne.s32.totalorder %s109, %s123
      %p125 = scmp.eq.s32.totalorder %s22, 0
      %p126 = por %p124, %p125
      %s128 = sadd.s32 %s127, 1
      %p131 = scmp.eq.s32.totalorder %s16, 1
      %p132 = scmp.ne.s32.totalorder %s127, %s129
      %p133 = scmp.eq.s32.totalorder %s16, 0
      %p134 = por %p132, %p133
      %p135 = scmp.ne.s32.totalorder %s127, %s129
      %p136 = scmp.eq.s32.totalorder %s21, 1
      %p137 = por %p135, %p136
      %p138 = scmp.ne.s32.totalorder %s129, %s130
      %p139 = scmp.eq.s32.totalorder %s21, 0
      %p140 = por %p138, %p139
      %p141 = scmp.ne.s32.totalorder %s129, %s130
      %p142 = scmp.eq.s32.totalorder %s22, 1
      %p143 = por %p141, %p142
      %p145 = scmp.ne.s32.totalorder %s130, %s144
      %p146 = scmp.eq.s32.totalorder %s22, 0
      %p147 = por %p145, %p146
      %s148 = ssub.s32 %s23, %s35
      %p149 = scmp.eq.s32.totalorder %s148, 0
      %s151 = sadd.s32 %s150, 1
      %s152 = scalar_select %p149, %s150, %s151
      %p155 = pneg %p149
      %p156 = scmp.eq.s32.totalorder %s16, 1
      %p157 = por %p155, %p156
      %p158 = scmp.ne.s32.totalorder %s150, %s153
      %p159 = scmp.eq.s32.totalorder %s16, 0
      %p160 = por %p158, %p159
      %p161 = scmp.ne.s32.totalorder %s150, %s153
      %p162 = scmp.eq.s32.totalorder %s21, 1
      %p163 = por %p161, %p162
      %p164 = scmp.ne.s32.totalorder %s153, %s154
      %p165 = scmp.eq.s32.totalorder %s21, 0
      %p166 = por %p164, %p165
      %p167 = scmp.ne.s32.totalorder %s153, %s154
      %p168 = scmp.eq.s32.totalorder %s22, 1
      %p169 = por %p167, %p168
      %p171 = scmp.ne.s32.totalorder %s154, %s170
      %p172 = scmp.eq.s32.totalorder %s22, 0
      %p173 = por %p171, %p172
      %p174 = scmp.le.s32.totalorder 1, %s16
      %p175 = scmp.lt.s32.totalorder %s16, 3
      %p176 = pnand %p174, %p175
      %p177 = pneg %p176
      // Predicated region
      $region9: #{tpu_custom_call.1} parent=5 // pred_check
        _
      $region10: #{tpu_custom_call.1} parent=5 // pred_check_branch
        %179 = sbr.rel (%p176) target = $region12
      $region11: #{tpu_custom_call.1} parent=5 // pred_region
        %s180 = ssub.s32 %s16, 1
        // Predicated region
        $region13: #{tpu_custom_call.1} parent=11 // pred_check
          %p181 = pneg %p77
        $region14: #{tpu_custom_call.1} parent=11 // pred_check_branch
          %183 = sbr.rel (%p181) target = $region16
        $region15: #{tpu_custom_call.1} parent=11 // pred_region
          %185 = vsyncadd [#allocation7], 0
          %s187 = sshll.u32 %s1, 4
          %s188 = int_to_ptr.hbm [resolvable:$true] %s187
          %s189 = sshll.u32 [#allocation6], 4
          %s190 = int_to_ptr.vmem [resolvable:$true] %s189
          %192 = dma.hbm_to_vmem [thread:$0]  %s188, 64, %s190, [#allocation7]
        $region16: #{tpu_custom_call.1} parent=11 // pred_fallthru
          _
        // Predicated region
        $region17: #{tpu_custom_call.1} parent=11 // pred_check
          %p193 = pneg %p98
        $region18: #{tpu_custom_call.1} parent=11 // pred_check_branch
          %195 = sbr.rel (%p193) target = $region20
        $region19: #{tpu_custom_call.1} parent=11 // pred_region
          _
        $region20: #{tpu_custom_call.1} parent=11 // pred_fallthru
          _
        // Predicated region
        $region21: #{tpu_custom_call.1} parent=11 // pred_check
          %p196 = pneg %p119
        $region22: #{tpu_custom_call.1} parent=11 // pred_check_branch
          %198 = sbr.rel (%p196) target = $region24
        $region23: #{tpu_custom_call.1} parent=11 // pred_region
          _
        $region24: #{tpu_custom_call.1} parent=11 // pred_fallthru
          _
        // Predicated region
        $region25: #{tpu_custom_call.1} parent=11 // pred_check
          %p199 = pneg %p140
        $region26: #{tpu_custom_call.1} parent=11 // pred_check_branch
          %201 = sbr.rel (%p199) target = $region28
        $region27: #{tpu_custom_call.1} parent=11 // pred_region
          %203 = vsyncadd [#allocation7], 0
          %s204 = sshll.u32 %s4, 4
          %s205 = int_to_ptr.hbm [resolvable:$true] %s204
          %s206 = sshll.u32 [#allocation8], 4
          %s207 = int_to_ptr.vmem [resolvable:$true] %s206
          %212 = dma.hbm_to_vmem [thread:$0]  %s205, 1024, %s207, [#allocation7], 64, 64, 4
        $region28: #{tpu_custom_call.1} parent=11 // pred_fallthru
          _
      $region12: #{tpu_custom_call.1} parent=5 // pred_fallthru
        _
      %p213 = scmp.lt.s32.totalorder %s16, 2
      // Predicated region
      $region29: #{tpu_custom_call.1} parent=5 // pred_check
        %p214 = pneg %p213
      $region30: #{tpu_custom_call.1} parent=5 // pred_check_branch
        %216 = sbr.rel (%p214) target = $region32
      $region31: #{tpu_custom_call.1} parent=5 // pred_region
        // Predicated region
        $region33: #{tpu_custom_call.1} parent=31 // pred_check
          %p217 = pneg %p50
        $region34: #{tpu_custom_call.1} parent=31 // pred_check_branch
          %219 = sbr.rel (%p217) target = $region36
        $region35: #{tpu_custom_call.1} parent=31 // pred_region
          %s220 = sand.u32 %s40, 1
          %s221 = scalar_lea.sflag [#allocation4], %s220
          %s222 = sand.u32 %s40, 1
          %s223 = smul.addr %s222, 32
          %s224 = scalar_lea.vmem [#allocation3], %s223
          %s225 = smul.u32 2, %s23
          %227 = vsyncadd %s221, 0
          %s228 = smul.addr %s225, 2
          %s229 = sadd.s32 %s24, %s228
          %s230 = smul.addr %s229, 4
          %s231 = scalar_lea.hbm %s0, %s230
          %s232 = sshll.u32 %s231, 4
          %s233 = int_to_ptr.hbm [resolvable:$true] %s232
          %s234 = sshll.u32 %s224, 4
          %s235 = int_to_ptr.vmem [resolvable:$true] %s234
          %240 = dma.hbm_to_vmem [thread:$0]  %s233, 512, %s235, %s221, 128, 64, 4
        $region36: #{tpu_custom_call.1} parent=31 // pred_fallthru
          _
      $region32: #{tpu_custom_call.1} parent=5 // pred_fallthru
        _
      %p241 = scmp.le.s32.totalorder 1, %s16
      %p242 = scmp.lt.s32.totalorder %s16, 3
      %p243 = pnand %p241, %p242
      %p244 = pneg %p243
      // Predicated region
      $region37: #{tpu_custom_call.1} parent=5 // pred_check
        _
      $region38: #{tpu_custom_call.1} parent=5 // pred_check_branch
        %246 = sbr.rel (%p243) target = $region40
      $region39: #{tpu_custom_call.1} parent=5 // pred_region
        %s247 = ssub.s32 %s16, 1
        %s248 = sand.u32 %s43, 1
        %s249 = scalar_lea.sflag [#allocation4], %s248
        %s250 = sand.u32 %s43, 1
        %s251 = smul.addr %s250, 32
        %s252 = scalar_lea.vmem [#allocation3], %s251
        // Predicated region
        $region41: #{tpu_custom_call.1} parent=39 // pred_check
          %p253 = pneg %p56
        $region42: #{tpu_custom_call.1} parent=39 // pred_check_branch
          %255 = sbr.rel (%p253) target = $region44
        $region43: #{tpu_custom_call.1} parent=39 // pred_region
          %257 = dma.done %s249, 512
        $region44: #{tpu_custom_call.1} parent=39 // pred_fallthru
          _
        // Predicated region
        $region45: #{tpu_custom_call.1} parent=39 // pred_check
          %p258 = pneg %p77
        $region46: #{tpu_custom_call.1} parent=39 // pred_check_branch
          %260 = sbr.rel (%p258) target = $region48
        $region47: #{tpu_custom_call.1} parent=39 // pred_region
          %262 = dma.done [#allocation7], 64
        $region48: #{tpu_custom_call.1} parent=39 // pred_fallthru
          _
        // Predicated region
        $region49: #{tpu_custom_call.1} parent=39 // pred_check
          %p263 = pneg %p140
        $region50: #{tpu_custom_call.1} parent=39 // pred_check_branch
          %265 = sbr.rel (%p263) target = $region52
        $region51: #{tpu_custom_call.1} parent=39 // pred_region
          %267 = dma.done [#allocation7], 1024
        $region52: #{tpu_custom_call.1} parent=39 // pred_fallthru
          _
        %s268 = sand.u32 %s43, 1
        %s269 = scalar_lea.sflag [#allocation4], %s268
        %s270 = sand.u32 %s43, 1
        %s271 = smul.addr %s270, 32
        %s272 = scalar_lea.vmem [#allocation3], %s271
        %p273 = pneg %p56
        %p274 = pneg %p53
        %p275 = pneg %p77
        %p276 = pneg %p74
        %p277 = pneg %p98
        %p278 = pneg %p95
        %p279 = pneg %p119
        %p280 = pneg %p116
        %p281 = pneg %p140
        %p282 = pneg %p137
        %p283 = pneg %p166
        %p284 = pneg %p163
        %s285 = smul.u32 2, %s25
        %s286 = smul.u32 2, %s25
        %v287 = vld [vmem:[%s252] sm:$0xf]
        %v288 = vld [vmem:[%s252 + $0x4] sm:$0xf]
        %v289 = vld [vmem:[%s252 + $0x8] sm:$0xf]
        %v290 = vld [vmem:[%s252 + $0xc] sm:$0xf]
        %v291 = vld [vmem:[%s252 + $0x10] sm:$0xf]
        %v292 = vld [vmem:[%s252 + $0x14] sm:$0xf]
        %v293 = vld [vmem:[%s252 + $0x18] sm:$0xf]
        %v294 = vld [vmem:[%s252 + $0x1c] sm:$0xf]
        %v295 = vunpack.c.l.bf16 %v287
        %v296 = vunpack.c.l.bf16 %v288
        %v297 = vunpack.c.l.bf16 %v289
        %v298 = vunpack.c.l.bf16 %v290
        %v299 = vunpack.c.l.bf16 %v291
        %v300 = vunpack.c.l.bf16 %v292
        %v301 = vunpack.c.l.bf16 %v293
        %v302 = vunpack.c.l.bf16 %v294
        %303 = vadd.xlane.f32.xlu0 %v295
        %v304 = vpop.xlane.xlu0 %303
        %305 = vadd.xlane.f32.xlu0 %v296
        %v306 = vpop.xlane.xlu0 %305
        %307 = vadd.xlane.f32.xlu0 %v297
        %v308 = vpop.xlane.xlu0 %307
        %309 = vadd.xlane.f32.xlu0 %v298
        %v310 = vpop.xlane.xlu0 %309
        %311 = vadd.xlane.f32.xlu0 %v299
        %v312 = vpop.xlane.xlu0 %311
        %313 = vadd.xlane.f32.xlu0 %v300
        %v314 = vpop.xlane.xlu0 %313
        %315 = vadd.xlane.f32.xlu0 %v301
        %v316 = vpop.xlane.xlu0 %315
        %317 = vadd.xlane.f32.xlu0 %v302
        %v318 = vpop.xlane.xlu0 %317
        %p319 = scmp.eq.s32.totalorder %s26, 0
        // Predicated region
        $region53: #{tpu_custom_call.1} parent=39 // pred_check
          %p320 = pneg %p319
        $region54: #{tpu_custom_call.1} parent=39 // pred_check_branch
          %322 = sbr.rel (%p320) target = $region56
        $region55: #{tpu_custom_call.1} parent=39 // pred_region
          %vm323 = vcmask 7168
          %324 = vst.msk [vmem:[#allocation2] sm:$0xff] %vm323, %v304
          %325 = vst.msk [vmem:[#allocation2 + $0x8] sm:$0xff] %vm323, %v306
          %326 = vst.msk [vmem:[#allocation2 + $0x10] sm:$0xff] %vm323, %v308
          %327 = vst.msk [vmem:[#allocation2 + $0x18] sm:$0xff] %vm323, %v310
          %328 = vst.msk [vmem:[#allocation2 + $0x20] sm:$0xff] %vm323, %v312
          %329 = vst.msk [vmem:[#allocation2 + $0x28] sm:$0xff] %vm323, %v314
          %330 = vst.msk [vmem:[#allocation2 + $0x30] sm:$0xff] %vm323, %v316
          %331 = vst.msk [vmem:[#allocation2 + $0x38] sm:$0xff] %vm323, %v318
        $region56: #{tpu_custom_call.1} parent=39 // pred_fallthru
          _
        %p332 = scmp.gt.s32.totalorder %s26, 0
        // Predicated region
        $region57: #{tpu_custom_call.1} parent=39 // pred_check
          %p333 = pneg %p332
        $region58: #{tpu_custom_call.1} parent=39 // pred_check_branch
          %335 = sbr.rel (%p333) target = $region60
        $region59: #{tpu_custom_call.1} parent=39 // pred_region
          %v336 = vld [vmem:[#allocation2] sm:$0xff]
          %v337 = vld [vmem:[#allocation2 + $0x8] sm:$0xff]
          %v338 = vld [vmem:[#allocation2 + $0x10] sm:$0xff]
          %v339 = vld [vmem:[#allocation2 + $0x18] sm:$0xff]
          %v340 = vld [vmem:[#allocation2 + $0x20] sm:$0xff]
          %v341 = vld [vmem:[#allocation2 + $0x28] sm:$0xff]
          %v342 = vld [vmem:[#allocation2 + $0x30] sm:$0xff]
          %v343 = vld [vmem:[#allocation2 + $0x38] sm:$0xff]
          %v344 = vadd.f32 %v336, %v304
          %v345 = vadd.f32 %v337, %v306
          %v346 = vadd.f32 %v338, %v308
          %v347 = vadd.f32 %v339, %v310
          %v348 = vadd.f32 %v340, %v312
          %v349 = vadd.f32 %v341, %v314
          %v350 = vadd.f32 %v342, %v316
          %v351 = vadd.f32 %v343, %v318
          %vm352 = vcmask 7168
          %353 = vst.msk [vmem:[#allocation2] sm:$0xff] %vm352, %v344
          %354 = vst.msk [vmem:[#allocation2 + $0x8] sm:$0xff] %vm352, %v345
          %355 = vst.msk [vmem:[#allocation2 + $0x10] sm:$0xff] %vm352, %v346
          %356 = vst.msk [vmem:[#allocation2 + $0x18] sm:$0xff] %vm352, %v347
          %357 = vst.msk [vmem:[#allocation2 + $0x20] sm:$0xff] %vm352, %v348
          %358 = vst.msk [vmem:[#allocation2 + $0x28] sm:$0xff] %vm352, %v349
          %359 = vst.msk [vmem:[#allocation2 + $0x30] sm:$0xff] %vm352, %v350
          %360 = vst.msk [vmem:[#allocation2 + $0x38] sm:$0xff] %vm352, %v351
        $region60: #{tpu_custom_call.1} parent=39 // pred_fallthru
          _
        %p361 = scmp.eq.s32.totalorder %s26, 1
        // Predicated region
        $region61: #{tpu_custom_call.1} parent=39 // pred_check
          %p362 = pneg %p361
        $region62: #{tpu_custom_call.1} parent=39 // pred_check_branch
          %364 = sbr.rel (%p362) target = $region64
        $region63: #{tpu_custom_call.1} parent=39 // pred_region
          %v365 = vld [vmem:[#allocation2] sm:$0xff]
          %v366 = vld [vmem:[#allocation2 + $0x8] sm:$0xff]
          %v367 = vmul.f32 %v365, 0.00390625
          %v368 = vmul.f32 %v366, 0.00390625
          %v369 = vld [vmem:[#allocation6] sm:$0x1]
          %371 = vset.pattern.permute.xlu0 0
          %372 = vperm.xlu0 %371, %v367
          %v373 = vpop.permute.xlu0 %372
          %376 = vset.pattern.permute.xlu0 0
          %377 = vperm.xlu0 %376, %v368
          %v378 = vpop.permute.xlu0 %377
          %v380 = vperm.slane %v369, 0
          %v381 = vmul.f32 %v373, %v380
          %v382 = vmul.f32 %v378, %v380
          %v383 = vadd.f32 %v381, 0.0
          %v384 = vadd.f32 %v382, 0.0
          %s385 = scalar_lea.vmem [#allocation2], 16
          %v386 = vld [vmem:[%s385] sm:$0xff]
          %v387 = vld [vmem:[%s385 + $0x8] sm:$0xff]
          %v388 = vmul.f32 %v386, 0.00390625
          %v389 = vmul.f32 %v387, 0.00390625
          %v390 = vld [vmem:[#allocation6 + $0x1] sm:$0x1]
          %392 = vset.pattern.permute.xlu0 0
          %393 = vperm.xlu0 %392, %v388
          %v394 = vpop.permute.xlu0 %393
          %397 = vset.pattern.permute.xlu0 0
          %398 = vperm.xlu0 %397, %v389
          %v399 = vpop.permute.xlu0 %398
          %v401 = vperm.slane %v390, 0
          %v402 = vmul.f32 %v394, %v401
          %v403 = vmul.f32 %v399, %v401
          %v404 = vadd.f32 %v383, %v402
          %v405 = vadd.f32 %v384, %v403
          %s406 = scalar_lea.vmem [#allocation2], 32
          %v407 = vld [vmem:[%s406] sm:$0xff]
          %v408 = vld [vmem:[%s406 + $0x8] sm:$0xff]
          %v409 = vmul.f32 %v407, 0.00390625
          %v410 = vmul.f32 %v408, 0.00390625
          %v411 = vld [vmem:[#allocation6 + $0x2] sm:$0x1]
          %413 = vset.pattern.permute.xlu0 0
          %414 = vperm.xlu0 %413, %v409
          %v415 = vpop.permute.xlu0 %414
          %418 = vset.pattern.permute.xlu0 0
          %419 = vperm.xlu0 %418, %v410
          %v420 = vpop.permute.xlu0 %419
          %v422 = vperm.slane %v411, 0
          %v423 = vmul.f32 %v415, %v422
          %v424 = vmul.f32 %v420, %v422
          %v425 = vadd.f32 %v404, %v423
          %v426 = vadd.f32 %v405, %v424
          %s427 = scalar_lea.vmem [#allocation2], 48
          %v428 = vld [vmem:[%s427] sm:$0xff]
          %v429 = vld [vmem:[%s427 + $0x8] sm:$0xff]
          %v430 = vmul.f32 %v428, 0.00390625
          %v431 = vmul.f32 %v429, 0.00390625
          %v432 = vld [vmem:[#allocation6 + $0x3] sm:$0x1]
          %434 = vset.pattern.permute.xlu0 0
          %435 = vperm.xlu0 %434, %v430
          %v436 = vpop.permute.xlu0 %435
          %439 = vset.pattern.permute.xlu0 0
          %440 = vperm.xlu0 %439, %v431
          %v441 = vpop.permute.xlu0 %440
          %v443 = vperm.slane %v432, 0
          %v444 = vmul.f32 %v436, %v443
          %v445 = vmul.f32 %v441, %v443
          %v446 = vadd.f32 %v425, %v444
          %v447 = vadd.f32 %v426, %v445
          %v448 = vmax.f32 %v446, 0.0
          %v449 = vmax.f32 %v447, 0.0
          %450 = vadd.xlane.f32.xlu0 %v448
          %v451 = vpop.xlane.xlu0 %450
          %452 = vadd.xlane.f32.xlu0 %v449
          %v453 = vpop.xlane.xlu0 %452
          %v454 = vmul.f32 %v451, 0.03125
          %v455 = vmul.f32 %v453, 0.03125
          %v456 = vsub.f32 %v448, %v454
          %v457 = vsub.f32 %v449, %v455
          %v458 = vmul.f32 %v456, %v456
          %v459 = vmul.f32 %v457, %v457
          %460 = vadd.xlane.f32.xlu0 %v458
          %v461 = vpop.xlane.xlu0 %460
          %462 = vadd.xlane.f32.xlu0 %v459
          %v463 = vpop.xlane.xlu0 %462
          %v464 = vmul.f32 %v454, %v454
          %v465 = vmul.f32 %v455, %v455
          %v466 = vmul.f32 %v464, 96.0
          %v467 = vmul.f32 %v465, 96.0
          %v468 = vsub.f32 %v461, %v466
          %v469 = vsub.f32 %v463, %v467
          %v470 = vmul.f32 %v468, 0.03125
          %v471 = vmul.f32 %v469, 0.03125
          %v472 = vmax.f32 %v470, 0.0
          %v473 = vmax.f32 %v471, 0.0
          %v474 = vadd.f32 %v472, 1e-05
          %v475 = vadd.f32 %v473, 1e-05
          %v476 = vrsqrt.pop %v474
          %v477 = vmul.f32 %v476, %v474
          %v478 = vmul.f32 %v477, %v476
          %v479 = vmul.f32 0.5, %v478
          %v480 = vsub.f32 1.5, %v479
          %v481 = vmul.f32 %v476, %v480
          %vm482 = vweird.f32 %v474
          %vm483 = vweird.f32 %v476
          %vm484 = vmor %vm482, %vm483
          %v485 = vsel %vm484, %v476, %v481
          %v486 = vrsqrt.pop %v475
          %v487 = vmul.f32 %v486, %v475
          %v488 = vmul.f32 %v487, %v486
          %v489 = vmul.f32 0.5, %v488
          %v490 = vsub.f32 1.5, %v489
          %v491 = vmul.f32 %v486, %v490
          %vm492 = vweird.f32 %v475
          %vm493 = vweird.f32 %v486
          %vm494 = vmor %vm492, %vm493
          %v495 = vsel %vm494, %v486, %v491
          %v496 = vmul.f32 %v456, %v485
          %v497 = vmul.f32 %v457, %v495
          %v498 = vld [vmem:[%s2] sm:$0x1]
          %v500 = vperm.slane %v498, 0
          %v502 = vmul.f32 %v496, %v500
          %v503 = vmul.f32 %v497, %v500
          %v504 = vld [vmem:[%s3] sm:$0x1]
          %v506 = vperm.slane %v504, 0
          %v508 = vadd.f32 %v502, %v506
          %v509 = vadd.f32 %v503, %v506
          %v510 = vpack.c.bf16 %v509, %v508
          %v511 = vld [vmem:[#allocation8] sm:$0xf]
          %v512 = vld [vmem:[#allocation8 + $0x4] sm:$0xf]
          %v513 = vld [vmem:[#allocation8 + $0x8] sm:$0xf]
          %v514 = vld [vmem:[#allocation8 + $0xc] sm:$0xf]
          %v515 = vld [vmem:[#allocation8 + $0x10] sm:$0xf]
          %v516 = vld [vmem:[#allocation8 + $0x14] sm:$0xf]
          %v517 = vld [vmem:[#allocation8 + $0x18] sm:$0xf]
          %v518 = vld [vmem:[#allocation8 + $0x1c] sm:$0xf]
          %v519 = vld [vmem:[#allocation8 + $0x20] sm:$0xf]
          %v520 = vld [vmem:[#allocation8 + $0x24] sm:$0xf]
          %v521 = vld [vmem:[#allocation8 + $0x28] sm:$0xf]
          %v522 = vld [vmem:[#allocation8 + $0x2c] sm:$0xf]
          %v523 = vld [vmem:[#allocation8 + $0x30] sm:$0xf]
          %v524 = vld [vmem:[#allocation8 + $0x34] sm:$0xf]
          %v525 = vld [vmem:[#allocation8 + $0x38] sm:$0xf]
          %v526 = vld [vmem:[#allocation8 + $0x3c] sm:$0xf]
          %v543 = vunpack.c.l.b16 %v511
          %v544 = vunpack.c.l.b16 %v512
          %v545 = vunpack.c.l.b16 %v513
          %v546 = vunpack.c.l.b16 %v514
          %v547 = vunpack.c.l.b16 %v515
          %v548 = vunpack.c.l.b16 %v516
          %v549 = vunpack.c.l.b16 %v517
          %v550 = vunpack.c.l.b16 %v518
          %v551 = vunpack.c.l.b16 %v519
          %v552 = vunpack.c.l.b16 %v520
          %v553 = vunpack.c.l.b16 %v521
          %v554 = vunpack.c.l.b16 %v522
          %v555 = vunpack.c.l.b16 %v523
          %v556 = vunpack.c.l.b16 %v524
          %v557 = vunpack.c.l.b16 %v525
          %v558 = vunpack.c.l.b16 %v526
          %v559 = vpack.c.b16 %v544, %v543
          %v560 = vpack.c.b16 %v546, %v545
          %v561 = vpack.c.b16 %v548, %v547
          %v562 = vpack.c.b16 %v550, %v549
          %v563 = vpack.c.b16 %v552, %v551
          %v564 = vpack.c.b16 %v554, %v553
          %v565 = vpack.c.b16 %v556, %v555
          %v566 = vpack.c.b16 %v558, %v557
          %575 = vmatpush.bf16.msra.mxu0 %v566
          %576 = vmatpush.bf16.msra.mxu0 %v565
          %577 = vmatpush.bf16.msra.mxu0 %v564
          %578 = vmatpush.bf16.msra.mxu0 %v563
          %579 = vmatpush.bf16.msra.mxu0 %v562
          %580 = vmatpush.bf16.msra.mxu0 %v561
          %581 = vmatpush.bf16.msra.mxu0 %v560
          %582 = vmatpush.bf16.msra.mxu0 %v559
          %583 = vmatmul.bf16.gmra.mxu0 %v510
          %v584 = vpop.f32.mrf.mxu0
          %v585 = vadd.f32 0.0, %v584
          %v586 = vpop.f32.mrf.mxu0
          %v587 = vadd.f32 0.0, %v586
          %588 = vdwg.mxu0
          %v589 = vmul.f32 %v585, %v585
          %v590 = vmul.f32 %v587, %v587
          %591 = vadd.xlane.f32.xlu0 %v589
          %v592 = vpop.xlane.xlu0 %591
          %593 = vadd.xlane.f32.xlu0 %v590
          %v594 = vpop.xlane.xlu0 %593
          %v595 = vmax.f32 %v592, 1e-24
          %v596 = vmax.f32 %v594, 1e-24
          %v597 = vrsqrt.pop %v595
          %v598 = vmul.f32 %v597, %v595
          %v599 = vmul.f32 %v598, %v597
          %v600 = vmul.f32 0.5, %v599
          %v601 = vsub.f32 1.5, %v600
          %v602 = vmul.f32 %v597, %v601
          %vm603 = vweird.f32 %v595
          %vm604 = vweird.f32 %v597
          %vm605 = vmor %vm603, %vm604
          %v606 = vsel %vm605, %v597, %v602
          %v607 = vrsqrt.pop %v596
          %v608 = vmul.f32 %v607, %v596
          %v609 = vmul.f32 %v608, %v607
          %v610 = vmul.f32 0.5, %v609
          %v611 = vsub.f32 1.5, %v610
          %v612 = vmul.f32 %v607, %v611
          %vm613 = vweird.f32 %v596
          %vm614 = vweird.f32 %v607
          %vm615 = vmor %vm613, %vm614
          %v616 = vsel %vm615, %v607, %v612
          %v617 = vmul.f32 %v585, %v606
          %v618 = vmul.f32 %v587, %v616
          %619 = vst [vmem:[#allocation9] sm:$0xff] %v617
          %620 = vst [vmem:[#allocation9 + $0x8] sm:$0xff] %v618
        $region64: #{tpu_custom_call.1} parent=39 // pred_fallthru
          _
        // Predicated region
        $region65: #{tpu_custom_call.1} parent=39 // pred_check
          %p621 = pneg %p163
        $region66: #{tpu_custom_call.1} parent=39 // pred_check_branch
          %623 = sbr.rel (%p621) target = $region68
        $region67: #{tpu_custom_call.1} parent=39 // pred_region
          %s624 = smul.u32 2, %s25
          %626 = vsyncadd [#allocation5], 0
          %s627 = smul.addr %s624, 8
          %s628 = scalar_lea.hbm %s5, %s627
          %s629 = sshll.u32 [#allocation9], 4
          %s630 = int_to_ptr.vmem [resolvable:$true] %s629
          %s631 = sshll.u32 %s628, 4
          %s632 = int_to_ptr.hbm [resolvable:$true] %s631
          %637 = dma.vmem_to_hbm [thread:$0]  %s630, 256, %s632, [#allocation5], 128, 128, 8
        $region68: #{tpu_custom_call.1} parent=39 // pred_fallthru
          _
        // Predicated region
        $region69: #{tpu_custom_call.1} parent=39 // pred_check
          %p638 = pneg %p163
        $region70: #{tpu_custom_call.1} parent=39 // pred_check_branch
          %640 = sbr.rel (%p638) target = $region72
        $region71: #{tpu_custom_call.1} parent=39 // pred_region
          %642 = dma.done [#allocation5], 256
        $region72: #{tpu_custom_call.1} parent=39 // pred_fallthru
          _
      $region40: #{tpu_custom_call.1} parent=5 // pred_fallthru
        _
      %p643 = scmp.le.s32.totalorder 2, %s16
      // Predicated region
      $region73: #{tpu_custom_call.1} parent=5 // pred_check
        %p644 = pneg %p643
      $region74: #{tpu_custom_call.1} parent=5 // pred_check_branch
        %646 = sbr.rel (%p644) target = $region76
      $region75: #{tpu_custom_call.1} parent=5 // pred_region
        %s647 = ssub.s32 %s16, 2
      $region76: #{tpu_custom_call.1} parent=5 // pred_fallthru
        _
    $region6: #{tpu_custom_call.1} parent=1 // loop_footer
      %s20 = sadd.s32 1, %s16
    $region7: #{tpu_custom_call.1} parent=1 // loop_footer_branch
      %15 = sbr.rel target = $region3
    $region8: #{tpu_custom_call.1} parent=1 // loop_exit
      _
    %648 = vsyncpa [#allocation4], 1
    %s649 = scalar_lea.sflag [#allocation4], 1
    %650 = vsyncpa %s649, 1
    %651 = vsyncpa [#allocation7], 1
    %652 = vsyncpa [#allocation5], 1
    %s653 = scalar_lea.sflag [#allocation5], 1
    %654 = vsyncpa %s653, 1

</llo_original>
